<compile_context>
chip_gen: v7x
topology: tpu7x:2x2x1
jax: 0.10.0
libtpu: 0.0.40
codegen_flags: <defaults>
</compile_context>

<pallas_src>
import jax
import jax.numpy as jnp
from jax.experimental import pallas as pl
from jax.experimental.pallas import tpu as pltpu


# ----------------------------- helpers --------------------------------------

def _round_up(n: int, m: int) -> int:
    return ((n + m - 1) // m) * m


def _batch_tiling(batch: int):
    """Pad batch to a sublane-friendly size and pick a batch tile."""
    if batch >= 128:
        b_pad = _round_up(batch, 128)
        tb = 128
    else:
        b_pad = max(8, _round_up(batch, 8))
        tb = b_pad
    return b_pad, tb


def _pad2d(x, rows, cols):
    r, c = x.shape
    return jnp.pad(x, ((0, rows - r), (0, cols - c)))


# ----------------------------- Pallas kernels -------------------------------

def _vae_fwd_kernel(x_ref, eps_ref, w1_ref, b1_ref, wlat_ref, blat_ref,
                    w2_ref, b2_ref, w3_ref, b3_ref,
                    recon_ref, stats_ref):
    """Fused encoder -> reparameterize -> decoder for one batch tile.

    x:    [TB, D]  bf16        w1:   [D, Hp]   bf16   b1:   [1, Hp]   f32
    eps:  [TB, Lp] f32         wlat: [Hp, 2Lp] bf16   blat: [1, 2Lp]  f32
                               w2:   [Lp, Hp]  bf16   b2:   [1, Hp]   f32
                               w3:   [Hp, D]   bf16   b3:   [1, D]    f32
    out:  recon [TB, D] f32,  stats = mu||logvar [TB, 2Lp] f32
    """
    lpad = eps_ref.shape[-1]

    # ---- encoder ----
    h = jnp.dot(x_ref[...], w1_ref[...], preferred_element_type=jnp.float32)
    h = jnp.maximum(h + b1_ref[...], 0.0).astype(jnp.bfloat16)        # ReLU

    # single matmul for [mu || logvar] (lane-dense 2*Lp = 256 output)
    stats = (jnp.dot(h, wlat_ref[...], preferred_element_type=jnp.float32)
             + blat_ref[...])
    stats_ref[...] = stats

    mu = stats[:, :lpad]
    logvar = stats[:, lpad:]
    # TODO(synk): consider jnp.clip(logvar, -10, 10) once this feeds a loss.

    # ---- reparameterize ----
    z = mu + eps_ref[...] * jnp.exp(0.5 * logvar)

    # ---- decoder ----
    h2 = jnp.dot(z.astype(jnp.bfloat16), w2_ref[...],
                 preferred_element_type=jnp.float32)
    h2 = jnp.maximum(h2 + b2_ref[...], 0.0).astype(jnp.bfloat16)      # ReLU
    recon_ref[...] = (jnp.dot(h2, w3_ref[...],
                              preferred_element_type=jnp.float32) + b3_ref[...])


def _decoder_only_kernel(z_ref, w2_ref, b2_ref, w3_ref, b3_ref, recon_ref):
    """Decoder for sample(): z -> recon (no reparameterization math)."""
    h = jnp.dot(z_ref[...].astype(jnp.bfloat16), w2_ref[...],
                preferred_element_type=jnp.float32)
    h = jnp.maximum(h + b2_ref[...], 0.0).astype(jnp.bfloat16)
    recon_ref[...] = (jnp.dot(h, w3_ref[...],
                              preferred_element_type=jnp.float32) + b3_ref[...])


# ----------------------------- kernel callers --------------------------------

def _call_vae_forward(x_pad, eps_pad, p, tb):
    b_pad, d = x_pad.shape
    lpad = eps_pad.shape[1]
    hpad = p["w1"].shape[1]
    grid = (b_pad // tb,)

    row_spec = lambda shape: pl.BlockSpec(shape, lambda i: (i, 0))
    full_spec = lambda shape: pl.BlockSpec(shape, lambda i: (0, 0))

    recon, stats = pl.pallas_call(
        _vae_fwd_kernel,
        out_shape=(jax.ShapeDtypeStruct((b_pad, d), jnp.float32),
                   jax.ShapeDtypeStruct((b_pad, 2 * lpad), jnp.float32)),
        grid_spec=pltpu.PrefetchScalarGridSpec(
            num_scalar_prefetch=0,
            grid=grid,
            in_specs=[
                row_spec((tb, d)),            # x
                row_spec((tb, lpad)),         # eps
                full_spec((d, hpad)),         # w1
                full_spec((1, hpad)),         # b1
                full_spec((hpad, 2 * lpad)),  # wlat = [wmu || wlv]
                full_spec((1, 2 * lpad)),     # blat
                full_spec((lpad, hpad)),      # w2
                full_spec((1, hpad)),         # b2
                full_spec((hpad, d)),         # w3
                full_spec((1, d)),            # b3
            ],
            out_specs=(row_spec((tb, d)), row_spec((tb, 2 * lpad))),
        ),
        compiler_params=pltpu.CompilerParams(
            dimension_semantics=("parallel",)),
    )(x_pad, eps_pad, p["w1"], p["b1"], p["wlat"], p["blat"],
      p["w2"], p["b2"], p["w3"], p["b3"])
    return recon, stats


def _call_decoder(z_pad, p, tb):
    b_pad, lpad = z_pad.shape
    hpad = p["w2"].shape[1]
    d = p["w3"].shape[1]
    grid = (b_pad // tb,)

    row_spec = lambda shape: pl.BlockSpec(shape, lambda i: (i, 0))
    full_spec = lambda shape: pl.BlockSpec(shape, lambda i: (0, 0))

    recon = pl.pallas_call(
        _decoder_only_kernel,
        out_shape=jax.ShapeDtypeStruct((b_pad, d), jnp.float32),
        grid_spec=pltpu.PrefetchScalarGridSpec(
            num_scalar_prefetch=0,
            grid=grid,
            in_specs=[
                row_spec((tb, lpad)),         # z
                full_spec((lpad, hpad)),      # w2
                full_spec((1, hpad)),         # b2
                full_spec((hpad, d)),         # w3
                full_spec((1, d)),            # b3
            ],
            out_specs=row_spec((tb, d)),
        ),
        compiler_params=pltpu.CompilerParams(
            dimension_semantics=("parallel",)),
    )(z_pad, p["w2"], p["b2"], p["w3"], p["b3"])
    return recon


# ------------------------------- Wrapper -------------------------------------

class BaseVarAutoencoderPallas:
    """JAX/Pallas version of the (abstract) BaseVarAutoencoder.

    Concrete forward: MLP encoder -> (mu, logvar) -> reparameterize ->
    MLP decoder -> reconstruction with the same NCHW shape as the input.
    Parameters are stored pre-padded (hidden -> 128, latent -> 128) and
    pre-cast to bf16 so the kernel sees MXU-friendly, lane-dense shapes.
    """

    def __init__(self, in_shape=(4, 16, 16), hidden=32, latent_dimension=8,
                 seed=0):
        c, h, w = in_shape
        d = c * h * w
        self.in_shape = in_shape
        self.in_dim = d
        self.hidden = hidden
        self.latent_dimension = latent_dimension
        self.hidden_pad = _round_up(max(hidden, 1), 128)
        self.latent_pad = _round_up(max(latent_dimension, 1), 128)
        if d % 128 != 0:
            raise ValueError("C*H*W must be a multiple of 128 for this kernel")

        hp, lp = self.hidden_pad, self.latent_pad
        k = jax.random.PRNGKey(seed)
        ks = jax.random.split(k, 5)
        s = lambda fan_in: 1.0 / jnp.sqrt(jnp.float32(fan_in))

        # un-padded f32 parameters (reference layout)
        w1 = jax.random.normal(ks[0], (d, hidden), jnp.float32) * s(d)
        wmu = jax.random.normal(ks[1], (hidden, latent_dimension),
                                jnp.float32) * s(hidden)
        wlv = jax.random.normal(ks[2], (hidden, latent_dimension),
                                jnp.float32) * s(hidden)
        w2 = jax.random.normal(ks[3], (latent_dimension, hidden),
                               jnp.float32) * s(latent_dimension)
        w3 = jax.random.normal(ks[4], (hidden, d), jnp.float32) * s(hidden)

        # [wmu || wlv] packed into one lane-dense projection of width 2*lp.
        wlat = jnp.zeros((hidden, 2 * lp), jnp.float32)
        wlat = wlat.at[:, :latent_dimension].set(wmu)
        wlat = wlat.at[:, lp:lp + latent_dimension].set(wlv)

        # padded + bf16 weights, f32 biases (zero padding keeps math exact:
        # padded hidden units are ReLU(0)=0, padded latent rows of w2 are 0).
        self.params = {
            "w1":   _pad2d(w1, d, hp).astype(jnp.bfloat16),
            "b1":   jnp.zeros((1, hp), jnp.float32),
            "wlat": _pad2d(wlat, hp, 2 * lp).astype(jnp.bfloat16),
            "blat": jnp.zeros((1, 2 * lp), jnp.float32),
            "w2":   _pad2d(w2, lp, hp).astype(jnp.bfloat16),
            "b2":   jnp.zeros((1, hp), jnp.float32),
            "w3":   _pad2d(w3, hp, d).astype(jnp.bfloat16),
            "b3":   jnp.zeros((1, d), jnp.float32),
        }

    def forward(self, x, rng):
        """x: [B, C, H, W] float32 (NCHW). Returns (recon, x, mu, logvar)."""
        b = x.shape[0]
        d, l, lp = self.in_dim, self.latent_dimension, self.latent_pad
        b_pad, tb = _batch_tiling(b)

        x_flat = x.reshape(b, d).astype(jnp.bfloat16)
        x_pad = jnp.pad(x_flat, ((0, b_pad - b), (0, 0)))

        # eps generated up front (not serialized between kernels)
        eps = jax.random.normal(rng, (b, l), jnp.float32)
        eps_pad = _pad2d(eps, b_pad, lp)

        recon_pad, stats = _call_vae_forward(x_pad, eps_pad, self.params, tb)

        recon = recon_pad[:b].reshape(x.shape)
        mu = stats[:b, :l]
        logvar = stats[:b, lp:lp + l]
        return recon, x, mu, logvar

    def sample(self, batch_size, rng):
        """Draw z ~ N(0, I) and decode (mirror of BaseVarAutoencoder.sample)."""
        l, lp = self.latent_dimension, self.latent_pad
        b_pad, tb = _batch_tiling(batch_size)

        z = jax.random.normal(rng, (batch_size, l), jnp.float32)
        z_pad = _pad2d(z, b_pad, lp)   # padded latent rows of w2 are zero

        recon_pad = _call_decoder(z_pad, self.params, tb)
        decoded = recon_pad[:batch_size].reshape(
            (batch_size,) + self.in_shape)
        return z, decoded

    # TODO(synk): loss() / generate() are abstract / NotImplemented in the
    # PyTorch base class; no forward semantics to translate.


# --------------------------------- Main --------------------------------------

if __name__ == "__main__":
    key = jax.random.PRNGKey(0)
    k_x, k_eps = jax.random.split(key)

    B, C, H, W = 2, 4, 16, 16
    x = jax.random.normal(k_x, (B, C, H, W), jnp.float32)

    model = BaseVarAutoencoderPallas(in_shape=(C, H, W), hidden=32,
                                     latent_dimension=8, seed=0)

    recon, x_out, mu, logvar = model.forward(x, k_eps)
    jax.block_until_ready((recon, mu, logvar))

    assert recon.shape == (B, C, H, W)
    assert mu.shape == (B, 8) and logvar.shape == (B, 8)
    assert bool(jnp.all(jnp.isfinite(recon)))
    assert bool(jnp.all(jnp.isfinite(mu)))
    assert bool(jnp.all(jnp.isfinite(logvar)))

    # also exercise sample() (decoder-only kernel)
    z, decoded = model.sample(batch_size=2, rng=jax.random.PRNGKey(1))
    jax.block_until_ready(decoded)
    assert decoded.shape == (2, C, H, W)
    assert bool(jnp.all(jnp.isfinite(decoded)))

    print("KERNEL_OK")
</pallas_src>

<mosaic_0001>
module attributes {stable_mosaic.version = 11 : i64} {
  func.func @_vae_fwd_kernel(%arg0: i32, %arg1: memref<8x1024xbf16, #tpu.memory_space<vmem>>, %arg2: memref<8x128xf32, #tpu.memory_space<vmem>>, %arg3: memref<1024x128xbf16, #tpu.memory_space<vmem>>, %arg4: memref<1x128xf32, #tpu.memory_space<vmem>>, %arg5: memref<128x256xbf16, #tpu.memory_space<vmem>>, %arg6: memref<1x256xf32, #tpu.memory_space<vmem>>, %arg7: memref<128x128xbf16, #tpu.memory_space<vmem>>, %arg8: memref<1x128xf32, #tpu.memory_space<vmem>>, %arg9: memref<128x1024xbf16, #tpu.memory_space<vmem>>, %arg10: memref<1x1024xf32, #tpu.memory_space<vmem>>, %arg11: memref<8x1024xf32, #tpu.memory_space<vmem>>, %arg12: memref<8x256xf32, #tpu.memory_space<vmem>>) attributes {dimension_semantics = [#tpu.dimension_semantics<parallel>], iteration_bounds = array<i64: 1>, scalar_prefetch = 0 : i64, scratch_operands = 0 : i64, tpu.core_type = #tpu.core_type<tc>, window_params = [{transform_indices = @transform_0, window_bounds = array<i64: 8, 1024>}, {transform_indices = @transform_1, window_bounds = array<i64: 8, 128>}, {pipeline_mode = #tpu.pipeline_mode<synchronous>, transform_indices = @transform_2, window_bounds = array<i64: 1024, 128>}, {pipeline_mode = #tpu.pipeline_mode<synchronous>, transform_indices = @transform_3, window_bounds = array<i64: 1, 128>}, {pipeline_mode = #tpu.pipeline_mode<synchronous>, transform_indices = @transform_4, window_bounds = array<i64: 128, 256>}, {pipeline_mode = #tpu.pipeline_mode<synchronous>, transform_indices = @transform_5, window_bounds = array<i64: 1, 256>}, {pipeline_mode = #tpu.pipeline_mode<synchronous>, transform_indices = @transform_6, window_bounds = array<i64: 128, 128>}, {pipeline_mode = #tpu.pipeline_mode<synchronous>, transform_indices = @transform_7, window_bounds = array<i64: 1, 128>}, {pipeline_mode = #tpu.pipeline_mode<synchronous>, transform_indices = @transform_8, window_bounds = array<i64: 128, 1024>}, {pipeline_mode = #tpu.pipeline_mode<synchronous>, transform_indices = @transform_9, window_bounds = array<i64: 1, 1024>}, {transform_indices = @transform_10, window_bounds = array<i64: 8, 1024>}, {transform_indices = @transform_11, window_bounds = array<i64: 8, 256>}]} {
    %c0 = arith.constant 0 : index
    %c0_0 = arith.constant 0 : index
    %0 = vector.load %arg1[%c0, %c0_0] : memref<8x1024xbf16, #tpu.memory_space<vmem>>, vector<8x1024xbf16>
    %c0_1 = arith.constant 0 : index
    %c0_2 = arith.constant 0 : index
    %1 = vector.load %arg3[%c0_1, %c0_2] : memref<1024x128xbf16, #tpu.memory_space<vmem>>, vector<1024x128xbf16>
    %cst = arith.constant dense<0.000000e+00> : vector<8x128xf32>
    %2 = tpu.matmul %0, %1, %cst {dimension_numbers = #tpu.dot_dimension_numbers<[1], [0], [0], [1], [0, 0, 1, 1], [], []>} : vector<8x1024xbf16>, vector<1024x128xbf16>, vector<8x128xf32> -> vector<8x128xf32>
    %c0_3 = arith.constant 0 : index
    %c0_4 = arith.constant 0 : index
    %3 = vector.load %arg4[%c0_3, %c0_4] : memref<1x128xf32, #tpu.memory_space<vmem>>, vector<1x128xf32>
    %4 = vector.broadcast %3 : vector<1x128xf32> to vector<8x128xf32>
    %5 = arith.addf %2, %4 : vector<8x128xf32>
    %cst_5 = arith.constant 0.000000e+00 : f32
    %6 = vector.broadcast %cst_5 : f32 to vector<8x128xf32>
    %7 = arith.maximumf %5, %6 : vector<8x128xf32>
    %8 = arith.truncf %7 : vector<8x128xf32> to vector<8x128xbf16>
    %c0_6 = arith.constant 0 : index
    %c0_7 = arith.constant 0 : index
    %9 = vector.load %arg5[%c0_6, %c0_7] : memref<128x256xbf16, #tpu.memory_space<vmem>>, vector<128x256xbf16>
    %cst_8 = arith.constant dense<0.000000e+00> : vector<8x256xf32>
    %10 = tpu.matmul %8, %9, %cst_8 {dimension_numbers = #tpu.dot_dimension_numbers<[1], [0], [0], [1], [0, 0, 1, 1], [], []>} : vector<8x128xbf16>, vector<128x256xbf16>, vector<8x256xf32> -> vector<8x256xf32>
    %c0_9 = arith.constant 0 : index
    %c0_10 = arith.constant 0 : index
    %11 = vector.load %arg6[%c0_9, %c0_10] : memref<1x256xf32, #tpu.memory_space<vmem>>, vector<1x256xf32>
    %12 = vector.broadcast %11 : vector<1x256xf32> to vector<8x256xf32>
    %13 = arith.addf %10, %12 : vector<8x256xf32>
    %c0_11 = arith.constant 0 : index
    %c0_12 = arith.constant 0 : index
    %14 = vector.load %arg12[%c0_11, %c0_12] : memref<8x256xf32, #tpu.memory_space<vmem>>, vector<8x256xf32>
    tpu.vector_store %arg12[%c0_11, %c0_12], %13 {strides = array<i32>} : memref<8x256xf32, #tpu.memory_space<vmem>>, vector<8x256xf32>,
    %15 = vector.extract_strided_slice %13 {offsets = [0, 0], sizes = [8, 128], strides = [1, 1]} : vector<8x256xf32> to vector<8x128xf32>
    %16 = vector.extract_strided_slice %13 {offsets = [0, 128], sizes = [8, 128], strides = [1, 1]} : vector<8x256xf32> to vector<8x128xf32>
    %c0_13 = arith.constant 0 : index
    %c0_14 = arith.constant 0 : index
    %17 = vector.load %arg2[%c0_13, %c0_14] : memref<8x128xf32, #tpu.memory_space<vmem>>, vector<8x128xf32>
    %cst_15 = arith.constant 5.000000e-01 : f32
    %18 = vector.broadcast %cst_15 : f32 to vector<8x128xf32>
    %19 = arith.mulf %18, %16 : vector<8x128xf32>
    %20 = math.exp %19 : vector<8x128xf32>
    %21 = arith.mulf %17, %20 : vector<8x128xf32>
    %22 = arith.addf %15, %21 : vector<8x128xf32>
    %23 = arith.truncf %22 : vector<8x128xf32> to vector<8x128xbf16>
    %c0_16 = arith.constant 0 : index
    %c0_17 = arith.constant 0 : index
    %24 = vector.load %arg7[%c0_16, %c0_17] : memref<128x128xbf16, #tpu.memory_space<vmem>>, vector<128x128xbf16>
    %cst_18 = arith.constant dense<0.000000e+00> : vector<8x128xf32>
    %25 = tpu.matmul %23, %24, %cst_18 {dimension_numbers = #tpu.dot_dimension_numbers<[1], [0], [0], [1], [0, 0, 1, 1], [], []>} : vector<8x128xbf16>, vector<128x128xbf16>, vector<8x128xf32> -> vector<8x128xf32>
    %c0_19 = arith.constant 0 : index
    %c0_20 = arith.constant 0 : index
    %26 = vector.load %arg8[%c0_19, %c0_20] : memref<1x128xf32, #tpu.memory_space<vmem>>, vector<1x128xf32>
    %27 = vector.broadcast %26 : vector<1x128xf32> to vector<8x128xf32>
    %28 = arith.addf %25, %27 : vector<8x128xf32>
    %cst_21 = arith.constant 0.000000e+00 : f32
    %29 = vector.broadcast %cst_21 : f32 to vector<8x128xf32>
    %30 = arith.maximumf %28, %29 : vector<8x128xf32>
    %31 = arith.truncf %30 : vector<8x128xf32> to vector<8x128xbf16>
    %c0_22 = arith.constant 0 : index
    %c0_23 = arith.constant 0 : index
    %32 = vector.load %arg9[%c0_22, %c0_23] : memref<128x1024xbf16, #tpu.memory_space<vmem>>, vector<128x1024xbf16>
    %cst_24 = arith.constant dense<0.000000e+00> : vector<8x1024xf32>
    %33 = tpu.matmul %31, %32, %cst_24 {dimension_numbers = #tpu.dot_dimension_numbers<[1], [0], [0], [1], [0, 0, 1, 1], [], []>} : vector<8x128xbf16>, vector<128x1024xbf16>, vector<8x1024xf32> -> vector<8x1024xf32>
    %c0_25 = arith.constant 0 : index
    %c0_26 = arith.constant 0 : index
    %34 = vector.load %arg10[%c0_25, %c0_26] : memref<1x1024xf32, #tpu.memory_space<vmem>>, vector<1x1024xf32>
    %35 = vector.broadcast %34 : vector<1x1024xf32> to vector<8x1024xf32>
    %36 = arith.addf %33, %35 : vector<8x1024xf32>
    %c0_27 = arith.constant 0 : index
    %c0_28 = arith.constant 0 : index
    %37 = vector.load %arg11[%c0_27, %c0_28] : memref<8x1024xf32, #tpu.memory_space<vmem>>, vector<8x1024xf32>
    tpu.vector_store %arg11[%c0_27, %c0_28], %36 {strides = array<i32>} : memref<8x1024xf32, #tpu.memory_space<vmem>>, vector<8x1024xf32>,
    return
  }
  func.func @transform_0(%arg0: i32) -> (i32, i32) {
    %c0_i32 = arith.constant 0 : i32
    %c0_i32_0 = arith.constant 0 : i32
    return %arg0, %c0_i32 : i32, i32
  }
  func.func @transform_1(%arg0: i32) -> (i32, i32) {
    %c0_i32 = arith.constant 0 : i32
    %c0_i32_0 = arith.constant 0 : i32
    return %arg0, %c0_i32 : i32, i32
  }
  func.func @transform_2(%arg0: i32) -> (i32, i32) {
    %c0_i32 = arith.constant 0 : i32
    %c0_i32_0 = arith.constant 0 : i32
    %c0_i32_1 = arith.constant 0 : i32
    return %c0_i32, %c0_i32_0 : i32, i32
  }
  func.func @transform_3(%arg0: i32) -> (i32, i32) {
    %c0_i32 = arith.constant 0 : i32
    %c0_i32_0 = arith.constant 0 : i32
    %c0_i32_1 = arith.constant 0 : i32
    return %c0_i32, %c0_i32_0 : i32, i32
  }
  func.func @transform_4(%arg0: i32) -> (i32, i32) {
    %c0_i32 = arith.constant 0 : i32
    %c0_i32_0 = arith.constant 0 : i32
    %c0_i32_1 = arith.constant 0 : i32
    return %c0_i32, %c0_i32_0 : i32, i32
  }
  func.func @transform_5(%arg0: i32) -> (i32, i32) {
    %c0_i32 = arith.constant 0 : i32
    %c0_i32_0 = arith.constant 0 : i32
    %c0_i32_1 = arith.constant 0 : i32
    return %c0_i32, %c0_i32_0 : i32, i32
  }
  func.func @transform_6(%arg0: i32) -> (i32, i32) {
    %c0_i32 = arith.constant 0 : i32
    %c0_i32_0 = arith.constant 0 : i32
    %c0_i32_1 = arith.constant 0 : i32
    return %c0_i32, %c0_i32_0 : i32, i32
  }
  func.func @transform_7(%arg0: i32) -> (i32, i32) {
    %c0_i32 = arith.constant 0 : i32
    %c0_i32_0 = arith.constant 0 : i32
    %c0_i32_1 = arith.constant 0 : i32
    return %c0_i32, %c0_i32_0 : i32, i32
  }
  func.func @transform_8(%arg0: i32) -> (i32, i32) {
    %c0_i32 = arith.constant 0 : i32
    %c0_i32_0 = arith.constant 0 : i32
    %c0_i32_1 = arith.constant 0 : i32
    return %c0_i32, %c0_i32_0 : i32, i32
  }
  func.func @transform_9(%arg0: i32) -> (i32, i32) {
    %c0_i32 = arith.constant 0 : i32
    %c0_i32_0 = arith.constant 0 : i32
    %c0_i32_1 = arith.constant 0 : i32
    return %c0_i32, %c0_i32_0 : i32, i32
  }
  func.func @transform_10(%arg0: i32) -> (i32, i32) {
    %c0_i32 = arith.constant 0 : i32
    %c0_i32_0 = arith.constant 0 : i32
    return %arg0, %c0_i32 : i32, i32
  }
  func.func @transform_11(%arg0: i32) -> (i32, i32) {
    %c0_i32 = arith.constant 0 : i32
    %c0_i32_0 = arith.constant 0 : i32
    return %arg0, %c0_i32 : i32, i32
  }
}

</mosaic_0001>

<llo_original>
// kernel: tpu_custom_call.1
$region0: #{tpu_custom_call.1}
  #allocation0 [shape = 'u32[]', space=smem, size = 0x4, offset = 0x4, fixed_abs, tag = 'smem constant byte address 0x4 - core index']
  #allocation1 [shape = 'u32[144,128]{1,0:T(1,128)}', space=vmem, size = 0x12000, scoped, tag = 'internal scratch']
  %s0 = inlined_call_operand.hbm [shape: bf16[8,1024], index: 0, kind: input, shape index: {}]
  %s1 = inlined_call_operand.hbm [shape: f32[8,128], index: 1, kind: input, shape index: {}]
  %s2 = inlined_call_operand.hbm [shape: bf16[1024,128], index: 2, kind: input, shape index: {}]
  %s3 = inlined_call_operand.vmem [shape: f32[1,128], index: 3, kind: input, shape index: {}]
  %s4 = inlined_call_operand.hbm [shape: bf16[128,256], index: 4, kind: input, shape index: {}]
  %s5 = inlined_call_operand.vmem [shape: f32[1,256], index: 5, kind: input, shape index: {}]
  %s6 = inlined_call_operand.hbm [shape: bf16[128,128], index: 6, kind: input, shape index: {}]
  %s7 = inlined_call_operand.vmem [shape: f32[1,128], index: 7, kind: input, shape index: {}]
  %s8 = inlined_call_operand.hbm [shape: bf16[128,1024], index: 8, kind: input, shape index: {}]
  %s9 = inlined_call_operand.vmem [shape: f32[1,1024], index: 9, kind: input, shape index: {}]
  %s10 = inlined_call_operand.hbm [shape: f32[8,1024], index: 10, kind: output, shape index: {0}]
  %s11 = inlined_call_operand.hbm [shape: f32[8,256], index: 11, kind: output, shape index: {1}]
  %12 = xla_tuple %s10, %s11
  %s13 = sld [smem:[#allocation0]]
  $region82: #{tpu_custom_call.1} parent=0
    _
  %s15 = ssub.s32 1, %s13
  %s16 = scalar_select 0, %s15, %s13
  $region1: #{tpu_custom_call.1} parent=0
    #allocation2 [shape = 'u8[16384]{0}', space=vmem, size = 0x4000, scoped, tag = 'input window, operand 0, single buffered']
    #allocation3 [shape = 's32[1]{0}', space=sflag, size = 0x4, scoped, tag = 'scoped memory for tpu_custom_call.1']
    #allocation4 [shape = 's32[1]{0}', space=sflag, size = 0x4, scoped, tag = 'scoped memory for tpu_custom_call.1']
    #allocation5 [shape = 'u8[4096]{0}', space=vmem, size = 0x1000, scoped, tag = 'input window, operand 1, single buffered']
    #allocation6 [shape = 's32[1]{0}', space=sflag, size = 0x4, scoped, tag = 'scoped memory for tpu_custom_call.1']
    #allocation7 [shape = 'u8[262144]{0}', space=vmem, size = 0x40000, scoped, tag = 'input window, operand 2, single buffered']
    #allocation8 [shape = 'u8[65536]{0}', space=vmem, size = 0x10000, scoped, tag = 'input window, operand 4, single buffered']
    #allocation9 [shape = 's32[1]{0}', space=sflag, size = 0x4, scoped, tag = 'scoped memory for tpu_custom_call.1']
    #allocation10 [shape = 'u8[32768]{0}', space=vmem, size = 0x8000, scoped, tag = 'input window, operand 6, single buffered']
    #allocation11 [shape = 'u8[262144]{0}', space=vmem, size = 0x40000, scoped, tag = 'input window, operand 8, single buffered']
    #allocation12 [shape = 's32[1]{0}', space=sflag, size = 0x4, scoped, tag = 'scoped memory for tpu_custom_call.1']
    #allocation13 [shape = 'u8[32768]{0}', space=vmem, size = 0x8000, scoped, tag = 'output window, operand 0, single buffered']
    #allocation14 [shape = 'u8[8192]{0}', space=vmem, size = 0x2000, scoped, tag = 'output window, operand 1, single buffered']
    #allocation15 [shape = 's32[1]{0}', space=sflag, size = 0x4, scoped, tag = 'scoped memory for tpu_custom_call.1']
    %17 = vsyncpa [#allocation3], 0
    %18 = vsyncpa [#allocation6], 0
    %19 = vsyncpa [#allocation9], 0
    %20 = vsyncpa [#allocation12], 0
    %21 = vsyncpa [#allocation4], 0
    %22 = vsyncpa [#allocation15], 0
    // Predicated region
    $region2: #{tpu_custom_call.1} parent=1 // pred_check
      _
    $region3: #{tpu_custom_call.1} parent=1 // pred_check_branch
      %24 = sbr.rel (0) target = $region5
    $region4: #{tpu_custom_call.1} parent=1 // pred_region
      %s26 = ssub.s32 512, 512
      %27 = vsyncadd [#allocation3], %s26
      %s29 = sshll.u32 [#allocation2], 4
      %s30 = int_to_ptr.vmem [resolvable:$true] %s29
      %32 = dma.hbm_to_vmem [thread:$0]  %s0, 512, %s30, [#allocation3]
    $region5: #{tpu_custom_call.1} parent=1 // pred_fallthru
      _
    // Predicated region
    $region6: #{tpu_custom_call.1} parent=1 // pred_check
      _
    $region7: #{tpu_custom_call.1} parent=1 // pred_check_branch
      %34 = sbr.rel (0) target = $region9
    $region8: #{tpu_custom_call.1} parent=1 // pred_region
      %s36 = ssub.s32 128, 128
      %37 = vsyncadd [#allocation6], %s36
      %s39 = sshll.u32 [#allocation5], 4
      %s40 = int_to_ptr.vmem [resolvable:$true] %s39
      %42 = dma.hbm_to_vmem [thread:$0]  %s1, 128, %s40, [#allocation6]
    $region9: #{tpu_custom_call.1} parent=1 // pred_fallthru
      _
    // Predicated region
    $region10: #{tpu_custom_call.1} parent=1 // pred_check
      _
    $region11: #{tpu_custom_call.1} parent=1 // pred_check_branch
      %44 = sbr.rel (0) target = $region13
    $region12: #{tpu_custom_call.1} parent=1 // pred_region
      %s46 = ssub.s32 8192, 8192
      %47 = vsyncadd [#allocation6], %s46
      %s48 = sshll.u32 [#allocation7], 4
      %s49 = int_to_ptr.vmem [resolvable:$true] %s48
      %54 = dma.hbm_to_vmem [thread:$0]  %s2, 8192, %s49, [#allocation6], 64, 64, 4
    $region13: #{tpu_custom_call.1} parent=1 // pred_fallthru
      _
    // Predicated region
    $region14: #{tpu_custom_call.1} parent=1 // pred_check
      _
    $region15: #{tpu_custom_call.1} parent=1 // pred_check_branch
      %56 = sbr.rel (0) target = $region17
    $region16: #{tpu_custom_call.1} parent=1 // pred_region
      _
    $region17: #{tpu_custom_call.1} parent=1 // pred_fallthru
      _
    // Predicated region
    $region18: #{tpu_custom_call.1} parent=1 // pred_check
      _
    $region19: #{tpu_custom_call.1} parent=1 // pred_check_branch
      %58 = sbr.rel (0) target = $region21
    $region20: #{tpu_custom_call.1} parent=1 // pred_region
      %s60 = ssub.s32 2048, 2048
      %61 = vsyncadd [#allocation9], %s60
      %s62 = sshll.u32 [#allocation8], 4
      %s63 = int_to_ptr.vmem [resolvable:$true] %s62
      %68 = dma.hbm_to_vmem [thread:$0]  %s4, 2048, %s63, [#allocation9], 128, 128, 8
    $region21: #{tpu_custom_call.1} parent=1 // pred_fallthru
      _
    // Predicated region
    $region22: #{tpu_custom_call.1} parent=1 // pred_check
      _
    $region23: #{tpu_custom_call.1} parent=1 // pred_check_branch
      %70 = sbr.rel (0) target = $region25
    $region24: #{tpu_custom_call.1} parent=1 // pred_region
      _
    $region25: #{tpu_custom_call.1} parent=1 // pred_fallthru
      _
    // Predicated region
    $region26: #{tpu_custom_call.1} parent=1 // pred_check
      _
    $region27: #{tpu_custom_call.1} parent=1 // pred_check_branch
      %72 = sbr.rel (0) target = $region29
    $region28: #{tpu_custom_call.1} parent=1 // pred_region
      %s74 = ssub.s32 1024, 1024
      %75 = vsyncadd [#allocation9], %s74
      %s76 = sshll.u32 [#allocation10], 4
      %s77 = int_to_ptr.vmem [resolvable:$true] %s76
      %82 = dma.hbm_to_vmem [thread:$0]  %s6, 1024, %s77, [#allocation9], 64, 64, 4
    $region29: #{tpu_custom_call.1} parent=1 // pred_fallthru
      _
    // Predicated region
    $region30: #{tpu_custom_call.1} parent=1 // pred_check
      _
    $region31: #{tpu_custom_call.1} parent=1 // pred_check_branch
      %84 = sbr.rel (0) target = $region33
    $region32: #{tpu_custom_call.1} parent=1 // pred_region
      _
    $region33: #{tpu_custom_call.1} parent=1 // pred_fallthru
      _
    // Predicated region
    $region34: #{tpu_custom_call.1} parent=1 // pred_check
      _
    $region35: #{tpu_custom_call.1} parent=1 // pred_check_branch
      %86 = sbr.rel (0) target = $region37
    $region36: #{tpu_custom_call.1} parent=1 // pred_region
      %s88 = ssub.s32 8192, 8192
      %89 = vsyncadd [#allocation12], %s88
      %s90 = sshll.u32 [#allocation11], 4
      %s91 = int_to_ptr.vmem [resolvable:$true] %s90
      %96 = dma.hbm_to_vmem [thread:$0]  %s8, 8192, %s91, [#allocation12], 512, 512, 32
    $region37: #{tpu_custom_call.1} parent=1 // pred_fallthru
      _
    // Predicated region
    $region38: #{tpu_custom_call.1} parent=1 // pred_check
      _
    $region39: #{tpu_custom_call.1} parent=1 // pred_check_branch
      %98 = sbr.rel (0) target = $region41
    $region40: #{tpu_custom_call.1} parent=1 // pred_region
      _
    $region41: #{tpu_custom_call.1} parent=1 // pred_fallthru
      _
    // Predicated region
    $region42: #{tpu_custom_call.1} parent=1 // pred_check
      _
    $region43: #{tpu_custom_call.1} parent=1 // pred_check_branch
      %100 = sbr.rel (0) target = $region45
    $region44: #{tpu_custom_call.1} parent=1 // pred_region
      %101 = dma.done [#allocation3], 512
    $region45: #{tpu_custom_call.1} parent=1 // pred_fallthru
      _
    // Predicated region
    $region46: #{tpu_custom_call.1} parent=1 // pred_check
      _
    $region47: #{tpu_custom_call.1} parent=1 // pred_check_branch
      %103 = sbr.rel (0) target = $region49
    $region48: #{tpu_custom_call.1} parent=1 // pred_region
      %104 = dma.done [#allocation6], 128
    $region49: #{tpu_custom_call.1} parent=1 // pred_fallthru
      _
    // Predicated region
    $region50: #{tpu_custom_call.1} parent=1 // pred_check
      _
    $region51: #{tpu_custom_call.1} parent=1 // pred_check_branch
      %106 = sbr.rel (0) target = $region53
    $region52: #{tpu_custom_call.1} parent=1 // pred_region
      %107 = dma.done [#allocation6], 8192
    $region53: #{tpu_custom_call.1} parent=1 // pred_fallthru
      _
    // Predicated region
    $region54: #{tpu_custom_call.1} parent=1 // pred_check
      _
    $region55: #{tpu_custom_call.1} parent=1 // pred_check_branch
      %109 = sbr.rel (0) target = $region57
    $region56: #{tpu_custom_call.1} parent=1 // pred_region
      %110 = dma.done [#allocation9], 2048
    $region57: #{tpu_custom_call.1} parent=1 // pred_fallthru
      _
    // Predicated region
    $region58: #{tpu_custom_call.1} parent=1 // pred_check
      _
    $region59: #{tpu_custom_call.1} parent=1 // pred_check_branch
      %112 = sbr.rel (0) target = $region61
    $region60: #{tpu_custom_call.1} parent=1 // pred_region
      %113 = dma.done [#allocation9], 1024
    $region61: #{tpu_custom_call.1} parent=1 // pred_fallthru
      _
    // Predicated region
    $region62: #{tpu_custom_call.1} parent=1 // pred_check
      _
    $region63: #{tpu_custom_call.1} parent=1 // pred_check_branch
      %115 = sbr.rel (0) target = $region65
    $region64: #{tpu_custom_call.1} parent=1 // pred_region
      %116 = dma.done [#allocation12], 8192
    $region65: #{tpu_custom_call.1} parent=1 // pred_fallthru
      _
    %v118 = vld [vmem:[#allocation2] sm:$0xff]
    %v119 = vld [vmem:[#allocation2 + $0x8] sm:$0xff]
    %v120 = vld [vmem:[#allocation2 + $0x10] sm:$0xff]
    %v121 = vld [vmem:[#allocation2 + $0x18] sm:$0xff]
    %v122 = vld [vmem:[#allocation7] sm:$0xf]
    %v123 = vld [vmem:[#allocation7 + $0x4] sm:$0xf]
    %v124 = vld [vmem:[#allocation7 + $0x8] sm:$0xf]
    %v125 = vld [vmem:[#allocation7 + $0xc] sm:$0xf]
    %v126 = vld [vmem:[#allocation7 + $0x10] sm:$0xf]
    %v127 = vld [vmem:[#allocation7 + $0x14] sm:$0xf]
    %v128 = vld [vmem:[#allocation7 + $0x18] sm:$0xf]
    %v129 = vld [vmem:[#allocation7 + $0x1c] sm:$0xf]
    %v130 = vld [vmem:[#allocation7 + $0x20] sm:$0xf]
    %v131 = vld [vmem:[#allocation7 + $0x24] sm:$0xf]
    %v132 = vld [vmem:[#allocation7 + $0x28] sm:$0xf]
    %v133 = vld [vmem:[#allocation7 + $0x2c] sm:$0xf]
    %v134 = vld [vmem:[#allocation7 + $0x30] sm:$0xf]
    %v135 = vld [vmem:[#allocation7 + $0x34] sm:$0xf]
    %v136 = vld [vmem:[#allocation7 + $0x38] sm:$0xf]
    %v137 = vld [vmem:[#allocation7 + $0x3c] sm:$0xf]
    %v138 = vld [vmem:[#allocation7 + $0x40] sm:$0xf]
    %v139 = vld [vmem:[#allocation7 + $0x44] sm:$0xf]
    %v140 = vld [vmem:[#allocation7 + $0x48] sm:$0xf]
    %v141 = vld [vmem:[#allocation7 + $0x4c] sm:$0xf]
    %v142 = vld [vmem:[#allocation7 + $0x50] sm:$0xf]
    %v143 = vld [vmem:[#allocation7 + $0x54] sm:$0xf]
    %v144 = vld [vmem:[#allocation7 + $0x58] sm:$0xf]
    %v145 = vld [vmem:[#allocation7 + $0x5c] sm:$0xf]
    %v146 = vld [vmem:[#allocation7 + $0x60] sm:$0xf]
    %v147 = vld [vmem:[#allocation7 + $0x64] sm:$0xf]
    %v148 = vld [vmem:[#allocation7 + $0x68] sm:$0xf]
    %v149 = vld [vmem:[#allocation7 + $0x6c] sm:$0xf]
    %v150 = vld [vmem:[#allocation7 + $0x70] sm:$0xf]
    %v151 = vld [vmem:[#allocation7 + $0x74] sm:$0xf]
    %v152 = vld [vmem:[#allocation7 + $0x78] sm:$0xf]
    %v153 = vld [vmem:[#allocation7 + $0x7c] sm:$0xf]
    %v154 = vld [vmem:[#allocation7 + $0x80] sm:$0xf]
    %v155 = vld [vmem:[#allocation7 + $0x84] sm:$0xf]
    %v156 = vld [vmem:[#allocation7 + $0x88] sm:$0xf]
    %v157 = vld [vmem:[#allocation7 + $0x8c] sm:$0xf]
    %v158 = vld [vmem:[#allocation7 + $0x90] sm:$0xf]
    %v159 = vld [vmem:[#allocation7 + $0x94] sm:$0xf]
    %v160 = vld [vmem:[#allocation7 + $0x98] sm:$0xf]
    %v161 = vld [vmem:[#allocation7 + $0x9c] sm:$0xf]
    %v162 = vld [vmem:[#allocation7 + $0xa0] sm:$0xf]
    %v163 = vld [vmem:[#allocation7 + $0xa4] sm:$0xf]
    %v164 = vld [vmem:[#allocation7 + $0xa8] sm:$0xf]
    %v165 = vld [vmem:[#allocation7 + $0xac] sm:$0xf]
    %v166 = vld [vmem:[#allocation7 + $0xb0] sm:$0xf]
    %v167 = vld [vmem:[#allocation7 + $0xb4] sm:$0xf]
    %v168 = vld [vmem:[#allocation7 + $0xb8] sm:$0xf]
    %v169 = vld [vmem:[#allocation7 + $0xbc] sm:$0xf]
    %v170 = vld [vmem:[#allocation7 + $0xc0] sm:$0xf]
    %v171 = vld [vmem:[#allocation7 + $0xc4] sm:$0xf]
    %v172 = vld [vmem:[#allocation7 + $0xc8] sm:$0xf]
    %v173 = vld [vmem:[#allocation7 + $0xcc] sm:$0xf]
    %v174 = vld [vmem:[#allocation7 + $0xd0] sm:$0xf]
    %v175 = vld [vmem:[#allocation7 + $0xd4] sm:$0xf]
    %v176 = vld [vmem:[#allocation7 + $0xd8] sm:$0xf]
    %v177 = vld [vmem:[#allocation7 + $0xdc] sm:$0xf]
    %v178 = vld [vmem:[#allocation7 + $0xe0] sm:$0xf]
    %v179 = vld [vmem:[#allocation7 + $0xe4] sm:$0xf]
    %v180 = vld [vmem:[#allocation7 + $0xe8] sm:$0xf]
    %v181 = vld [vmem:[#allocation7 + $0xec] sm:$0xf]
    %v182 = vld [vmem:[#allocation7 + $0xf0] sm:$0xf]
    %v183 = vld [vmem:[#allocation7 + $0xf4] sm:$0xf]
    %v184 = vld [vmem:[#allocation7 + $0xf8] sm:$0xf]
    %v185 = vld [vmem:[#allocation7 + $0xfc] sm:$0xf]
    %v186 = vld [vmem:[#allocation7 + $0x100] sm:$0xf]
    %v187 = vld [vmem:[#allocation7 + $0x104] sm:$0xf]
    %v188 = vld [vmem:[#allocation7 + $0x108] sm:$0xf]
    %v189 = vld [vmem:[#allocation7 + $0x10c] sm:$0xf]
    %v190 = vld [vmem:[#allocation7 + $0x110] sm:$0xf]
    %v191 = vld [vmem:[#allocation7 + $0x114] sm:$0xf]
    %v192 = vld [vmem:[#allocation7 + $0x118] sm:$0xf]
    %v193 = vld [vmem:[#allocation7 + $0x11c] sm:$0xf]
    %v194 = vld [vmem:[#allocation7 + $0x120] sm:$0xf]
    %v195 = vld [vmem:[#allocation7 + $0x124] sm:$0xf]
    %v196 = vld [vmem:[#allocation7 + $0x128] sm:$0xf]
    %v197 = vld [vmem:[#allocation7 + $0x12c] sm:$0xf]
    %v198 = vld [vmem:[#allocation7 + $0x130] sm:$0xf]
    %v199 = vld [vmem:[#allocation7 + $0x134] sm:$0xf]
    %v200 = vld [vmem:[#allocation7 + $0x138] sm:$0xf]
    %v201 = vld [vmem:[#allocation7 + $0x13c] sm:$0xf]
    %v202 = vld [vmem:[#allocation7 + $0x140] sm:$0xf]
    %v203 = vld [vmem:[#allocation7 + $0x144] sm:$0xf]
    %v204 = vld [vmem:[#allocation7 + $0x148] sm:$0xf]
    %v205 = vld [vmem:[#allocation7 + $0x14c] sm:$0xf]
    %v206 = vld [vmem:[#allocation7 + $0x150] sm:$0xf]
    %v207 = vld [vmem:[#allocation7 + $0x154] sm:$0xf]
    %v208 = vld [vmem:[#allocation7 + $0x158] sm:$0xf]
    %v209 = vld [vmem:[#allocation7 + $0x15c] sm:$0xf]
    %v210 = vld [vmem:[#allocation7 + $0x160] sm:$0xf]
    %v211 = vld [vmem:[#allocation7 + $0x164] sm:$0xf]
    %v212 = vld [vmem:[#allocation7 + $0x168] sm:$0xf]
    %v213 = vld [vmem:[#allocation7 + $0x16c] sm:$0xf]
    %v214 = vld [vmem:[#allocation7 + $0x170] sm:$0xf]
    %v215 = vld [vmem:[#allocation7 + $0x174] sm:$0xf]
    %v216 = vld [vmem:[#allocation7 + $0x178] sm:$0xf]
    %v217 = vld [vmem:[#allocation7 + $0x17c] sm:$0xf]
    %v218 = vld [vmem:[#allocation7 + $0x180] sm:$0xf]
    %v219 = vld [vmem:[#allocation7 + $0x184] sm:$0xf]
    %v220 = vld [vmem:[#allocation7 + $0x188] sm:$0xf]
    %v221 = vld [vmem:[#allocation7 + $0x18c] sm:$0xf]
    %v222 = vld [vmem:[#allocation7 + $0x190] sm:$0xf]
    %v223 = vld [vmem:[#allocation7 + $0x194] sm:$0xf]
    %v224 = vld [vmem:[#allocation7 + $0x198] sm:$0xf]
    %v225 = vld [vmem:[#allocation7 + $0x19c] sm:$0xf]
    %v226 = vld [vmem:[#allocation7 + $0x1a0] sm:$0xf]
    %v227 = vld [vmem:[#allocation7 + $0x1a4] sm:$0xf]
    %v228 = vld [vmem:[#allocation7 + $0x1a8] sm:$0xf]
    %v229 = vld [vmem:[#allocation7 + $0x1ac] sm:$0xf]
    %v230 = vld [vmem:[#allocation7 + $0x1b0] sm:$0xf]
    %v231 = vld [vmem:[#allocation7 + $0x1b4] sm:$0xf]
    %v232 = vld [vmem:[#allocation7 + $0x1b8] sm:$0xf]
    %v233 = vld [vmem:[#allocation7 + $0x1bc] sm:$0xf]
    %v234 = vld [vmem:[#allocation7 + $0x1c0] sm:$0xf]
    %v235 = vld [vmem:[#allocation7 + $0x1c4] sm:$0xf]
    %v236 = vld [vmem:[#allocation7 + $0x1c8] sm:$0xf]
    %v237 = vld [vmem:[#allocation7 + $0x1cc] sm:$0xf]
    %v238 = vld [vmem:[#allocation7 + $0x1d0] sm:$0xf]
    %v239 = vld [vmem:[#allocation7 + $0x1d4] sm:$0xf]
    %v240 = vld [vmem:[#allocation7 + $0x1d8] sm:$0xf]
    %v241 = vld [vmem:[#allocation7 + $0x1dc] sm:$0xf]
    %v242 = vld [vmem:[#allocation7 + $0x1e0] sm:$0xf]
    %v243 = vld [vmem:[#allocation7 + $0x1e4] sm:$0xf]
    %v244 = vld [vmem:[#allocation7 + $0x1e8] sm:$0xf]
    %v245 = vld [vmem:[#allocation7 + $0x1ec] sm:$0xf]
    %v246 = vld [vmem:[#allocation7 + $0x1f0] sm:$0xf]
    %v247 = vld [vmem:[#allocation7 + $0x1f4] sm:$0xf]
    %v248 = vld [vmem:[#allocation7 + $0x1f8] sm:$0xf]
    %v249 = vld [vmem:[#allocation7 + $0x1fc] sm:$0xf]
    %v250 = vld [vmem:[%s3] sm:$0x1]
    %v252 = vlaneseq
    %v253 = vshrl.u32 %v252, 7
    %v254 = vsub.s32 0, %v253
    %v255 = vrot.slane %v250, %v254
    %v261 = vunpack.c.l.b16 %v118
    %v262 = vunpack.c.h.b16 %v118
    %v263 = vunpack.c.l.b16 %v119
    %v264 = vunpack.c.h.b16 %v119
    %v265 = vunpack.c.l.b16 %v120
    %v266 = vunpack.c.h.b16 %v120
    %v267 = vunpack.c.l.b16 %v121
    %v268 = vunpack.c.h.b16 %v121
    %v269 = vpack.c.b16 %v261, %v261
    %v270 = vpack.c.b16 %v262, %v262
    %v271 = vpack.c.b16 %v263, %v263
    %v272 = vpack.c.b16 %v264, %v264
    %v273 = vpack.c.b16 %v265, %v265
    %v274 = vpack.c.b16 %v266, %v266
    %v275 = vpack.c.b16 %v267, %v267
    %v276 = vpack.c.b16 %v268, %v268
    %v413 = vunpack.c.l.b16 %v122
    %v414 = vunpack.c.l.b16 %v123
    %v415 = vunpack.c.l.b16 %v124
    %v416 = vunpack.c.l.b16 %v125
    %v417 = vunpack.c.l.b16 %v126
    %v418 = vunpack.c.l.b16 %v127
    %v419 = vunpack.c.l.b16 %v128
    %v420 = vunpack.c.l.b16 %v129
    %v421 = vunpack.c.l.b16 %v130
    %v422 = vunpack.c.l.b16 %v131
    %v423 = vunpack.c.l.b16 %v132
    %v424 = vunpack.c.l.b16 %v133
    %v425 = vunpack.c.l.b16 %v134
    %v426 = vunpack.c.l.b16 %v135
    %v427 = vunpack.c.l.b16 %v136
    %v428 = vunpack.c.l.b16 %v137
    %v429 = vunpack.c.l.b16 %v138
    %v430 = vunpack.c.l.b16 %v139
    %v431 = vunpack.c.l.b16 %v140
    %v432 = vunpack.c.l.b16 %v141
    %v433 = vunpack.c.l.b16 %v142
    %v434 = vunpack.c.l.b16 %v143
    %v435 = vunpack.c.l.b16 %v144
    %v436 = vunpack.c.l.b16 %v145
    %v437 = vunpack.c.l.b16 %v146
    %v438 = vunpack.c.l.b16 %v147
    %v439 = vunpack.c.l.b16 %v148
    %v440 = vunpack.c.l.b16 %v149
    %v441 = vunpack.c.l.b16 %v150
    %v442 = vunpack.c.l.b16 %v151
    %v443 = vunpack.c.l.b16 %v152
    %v444 = vunpack.c.l.b16 %v153
    %v445 = vunpack.c.l.b16 %v154
    %v446 = vunpack.c.l.b16 %v155
    %v447 = vunpack.c.l.b16 %v156
    %v448 = vunpack.c.l.b16 %v157
    %v449 = vunpack.c.l.b16 %v158
    %v450 = vunpack.c.l.b16 %v159
    %v451 = vunpack.c.l.b16 %v160
    %v452 = vunpack.c.l.b16 %v161
    %v453 = vunpack.c.l.b16 %v162
    %v454 = vunpack.c.l.b16 %v163
    %v455 = vunpack.c.l.b16 %v164
    %v456 = vunpack.c.l.b16 %v165
    %v457 = vunpack.c.l.b16 %v166
    %v458 = vunpack.c.l.b16 %v167
    %v459 = vunpack.c.l.b16 %v168
    %v460 = vunpack.c.l.b16 %v169
    %v461 = vunpack.c.l.b16 %v170
    %v462 = vunpack.c.l.b16 %v171
    %v463 = vunpack.c.l.b16 %v172
    %v464 = vunpack.c.l.b16 %v173
    %v465 = vunpack.c.l.b16 %v174
    %v466 = vunpack.c.l.b16 %v175
    %v467 = vunpack.c.l.b16 %v176
    %v468 = vunpack.c.l.b16 %v177
    %v469 = vunpack.c.l.b16 %v178
    %v470 = vunpack.c.l.b16 %v179
    %v471 = vunpack.c.l.b16 %v180
    %v472 = vunpack.c.l.b16 %v181
    %v473 = vunpack.c.l.b16 %v182
    %v474 = vunpack.c.l.b16 %v183
    %v475 = vunpack.c.l.b16 %v184
    %v476 = vunpack.c.l.b16 %v185
    %v477 = vunpack.c.l.b16 %v186
    %v478 = vunpack.c.l.b16 %v187
    %v479 = vunpack.c.l.b16 %v188
    %v480 = vunpack.c.l.b16 %v189
    %v481 = vunpack.c.l.b16 %v190
    %v482 = vunpack.c.l.b16 %v191
    %v483 = vunpack.c.l.b16 %v192
    %v484 = vunpack.c.l.b16 %v193
    %v485 = vunpack.c.l.b16 %v194
    %v486 = vunpack.c.l.b16 %v195
    %v487 = vunpack.c.l.b16 %v196
    %v488 = vunpack.c.l.b16 %v197
    %v489 = vunpack.c.l.b16 %v198
    %v490 = vunpack.c.l.b16 %v199
    %v491 = vunpack.c.l.b16 %v200
    %v492 = vunpack.c.l.b16 %v201
    %v493 = vunpack.c.l.b16 %v202
    %v494 = vunpack.c.l.b16 %v203
    %v495 = vunpack.c.l.b16 %v204
    %v496 = vunpack.c.l.b16 %v205
    %v497 = vunpack.c.l.b16 %v206
    %v498 = vunpack.c.l.b16 %v207
    %v499 = vunpack.c.l.b16 %v208
    %v500 = vunpack.c.l.b16 %v209
    %v501 = vunpack.c.l.b16 %v210
    %v502 = vunpack.c.l.b16 %v211
    %v503 = vunpack.c.l.b16 %v212
    %v504 = vunpack.c.l.b16 %v213
    %v505 = vunpack.c.l.b16 %v214
    %v506 = vunpack.c.l.b16 %v215
    %v507 = vunpack.c.l.b16 %v216
    %v508 = vunpack.c.l.b16 %v217
    %v509 = vunpack.c.l.b16 %v218
    %v510 = vunpack.c.l.b16 %v219
    %v511 = vunpack.c.l.b16 %v220
    %v512 = vunpack.c.l.b16 %v221
    %v513 = vunpack.c.l.b16 %v222
    %v514 = vunpack.c.l.b16 %v223
    %v515 = vunpack.c.l.b16 %v224
    %v516 = vunpack.c.l.b16 %v225
    %v517 = vunpack.c.l.b16 %v226
    %v518 = vunpack.c.l.b16 %v227
    %v519 = vunpack.c.l.b16 %v228
    %v520 = vunpack.c.l.b16 %v229
    %v521 = vunpack.c.l.b16 %v230
    %v522 = vunpack.c.l.b16 %v231
    %v523 = vunpack.c.l.b16 %v232
    %v524 = vunpack.c.l.b16 %v233
    %v525 = vunpack.c.l.b16 %v234
    %v526 = vunpack.c.l.b16 %v235
    %v527 = vunpack.c.l.b16 %v236
    %v528 = vunpack.c.l.b16 %v237
    %v529 = vunpack.c.l.b16 %v238
    %v530 = vunpack.c.l.b16 %v239
    %v531 = vunpack.c.l.b16 %v240
    %v532 = vunpack.c.l.b16 %v241
    %v533 = vunpack.c.l.b16 %v242
    %v534 = vunpack.c.l.b16 %v243
    %v535 = vunpack.c.l.b16 %v244
    %v536 = vunpack.c.l.b16 %v245
    %v537 = vunpack.c.l.b16 %v246
    %v538 = vunpack.c.l.b16 %v247
    %v539 = vunpack.c.l.b16 %v248
    %v540 = vunpack.c.l.b16 %v249
    %v541 = vpack.c.b16 %v414, %v413
    %v542 = vpack.c.b16 %v416, %v415
    %v543 = vpack.c.b16 %v418, %v417
    %v544 = vpack.c.b16 %v420, %v419
    %v545 = vpack.c.b16 %v422, %v421
    %v546 = vpack.c.b16 %v424, %v423
    %v547 = vpack.c.b16 %v426, %v425
    %v548 = vpack.c.b16 %v428, %v427
    %v549 = vpack.c.b16 %v430, %v429
    %v550 = vpack.c.b16 %v432, %v431
    %v551 = vpack.c.b16 %v434, %v433
    %v552 = vpack.c.b16 %v436, %v435
    %v553 = vpack.c.b16 %v438, %v437
    %v554 = vpack.c.b16 %v440, %v439
    %v555 = vpack.c.b16 %v442, %v441
    %v556 = vpack.c.b16 %v444, %v443
    %v557 = vpack.c.b16 %v446, %v445
    %v558 = vpack.c.b16 %v448, %v447
    %v559 = vpack.c.b16 %v450, %v449
    %v560 = vpack.c.b16 %v452, %v451
    %v561 = vpack.c.b16 %v454, %v453
    %v562 = vpack.c.b16 %v456, %v455
    %v563 = vpack.c.b16 %v458, %v457
    %v564 = vpack.c.b16 %v460, %v459
    %v565 = vpack.c.b16 %v462, %v461
    %v566 = vpack.c.b16 %v464, %v463
    %v567 = vpack.c.b16 %v466, %v465
    %v568 = vpack.c.b16 %v468, %v467
    %v569 = vpack.c.b16 %v470, %v469
    %v570 = vpack.c.b16 %v472, %v471
    %v571 = vpack.c.b16 %v474, %v473
    %v572 = vpack.c.b16 %v476, %v475
    %v573 = vpack.c.b16 %v478, %v477
    %v574 = vpack.c.b16 %v480, %v479
    %v575 = vpack.c.b16 %v482, %v481
    %v576 = vpack.c.b16 %v484, %v483
    %v577 = vpack.c.b16 %v486, %v485
    %v578 = vpack.c.b16 %v488, %v487
    %v579 = vpack.c.b16 %v490, %v489
    %v580 = vpack.c.b16 %v492, %v491
    %v581 = vpack.c.b16 %v494, %v493
    %v582 = vpack.c.b16 %v496, %v495
    %v583 = vpack.c.b16 %v498, %v497
    %v584 = vpack.c.b16 %v500, %v499
    %v585 = vpack.c.b16 %v502, %v501
    %v586 = vpack.c.b16 %v504, %v503
    %v587 = vpack.c.b16 %v506, %v505
    %v588 = vpack.c.b16 %v508, %v507
    %v589 = vpack.c.b16 %v510, %v509
    %v590 = vpack.c.b16 %v512, %v511
    %v591 = vpack.c.b16 %v514, %v513
    %v592 = vpack.c.b16 %v516, %v515
    %v593 = vpack.c.b16 %v518, %v517
    %v594 = vpack.c.b16 %v520, %v519
    %v595 = vpack.c.b16 %v522, %v521
    %v596 = vpack.c.b16 %v524, %v523
    %v597 = vpack.c.b16 %v526, %v525
    %v598 = vpack.c.b16 %v528, %v527
    %v599 = vpack.c.b16 %v530, %v529
    %v600 = vpack.c.b16 %v532, %v531
    %v601 = vpack.c.b16 %v534, %v533
    %v602 = vpack.c.b16 %v536, %v535
    %v603 = vpack.c.b16 %v538, %v537
    %v604 = vpack.c.b16 %v540, %v539
    %669 = vmatprep.subr.bf16.mxu0 0
    %670 = vmatpush1.bf16.msra.mxu0 %v541
    %671 = vmatprep.subr.bf16.mxu0 0
    %672 = vmatpush1.bf16.msra.mxu0 %v542
    %673 = vmatprep.subr.bf16.mxu0 0
    %674 = vmatpush1.bf16.msra.mxu0 %v543
    %675 = vmatprep.subr.bf16.mxu0 0
    %676 = vmatpush1.bf16.msra.mxu0 %v544
    %677 = vmatprep.subr.bf16.mxu0 0
    %678 = vmatpush1.bf16.msra.mxu0 %v545
    %679 = vmatprep.subr.bf16.mxu0 0
    %680 = vmatpush1.bf16.msra.mxu0 %v546
    %681 = vmatprep.subr.bf16.mxu0 0
    %682 = vmatpush1.bf16.msra.mxu0 %v547
    %683 = vmatprep.subr.bf16.mxu0 0
    %684 = vmatpush1.bf16.msra.mxu0 %v548
    %685 = vmatprep.subr.bf16.mxu0 0
    %686 = vmatpush1.bf16.msra.mxu0 %v549
    %687 = vmatprep.subr.bf16.mxu0 0
    %688 = vmatpush1.bf16.msra.mxu0 %v550
    %689 = vmatprep.subr.bf16.mxu0 0
    %690 = vmatpush1.bf16.msra.mxu0 %v551
    %691 = vmatprep.subr.bf16.mxu0 0
    %692 = vmatpush1.bf16.msra.mxu0 %v552
    %693 = vmatprep.subr.bf16.mxu0 0
    %694 = vmatpush1.bf16.msra.mxu0 %v553
    %695 = vmatprep.subr.bf16.mxu0 0
    %696 = vmatpush1.bf16.msra.mxu0 %v554
    %697 = vmatprep.subr.bf16.mxu0 0
    %698 = vmatpush1.bf16.msra.mxu0 %v555
    %699 = vmatprep.subr.bf16.mxu0 0
    %700 = vmatpush1.bf16.msra.mxu0 %v556
    %701 = vmatprep.mubr.bf16.mxu0 %v270
    %702 = vmatmul.mubr.bf16.gmra.mrb[0].mxu0 %v269
    %v703 = vpop.f32.mrb[0].mxu0
    %v704 = vadd.f32 %v255, %v703
    %v705 = vpop.f32.mrb[0].mxu0
    %v706 = vpop.f32.mrb[0].mxu0
    %v707 = vpop.f32.mrb[0].mxu0
    %708 = vdwg.mxu0
    %709 = vmatprep.subr.bf16.mxu0 0
    %710 = vmatpush1.bf16.msra.mxu0 %v557
    %711 = vmatprep.subr.bf16.mxu0 0
    %712 = vmatpush1.bf16.msra.mxu0 %v558
    %713 = vmatprep.subr.bf16.mxu0 0
    %714 = vmatpush1.bf16.msra.mxu0 %v559
    %715 = vmatprep.subr.bf16.mxu0 0
    %716 = vmatpush1.bf16.msra.mxu0 %v560
    %717 = vmatprep.subr.bf16.mxu0 0
    %718 = vmatpush1.bf16.msra.mxu0 %v561
    %719 = vmatprep.subr.bf16.mxu0 0
    %720 = vmatpush1.bf16.msra.mxu0 %v562
    %721 = vmatprep.subr.bf16.mxu0 0
    %722 = vmatpush1.bf16.msra.mxu0 %v563
    %723 = vmatprep.subr.bf16.mxu0 0
    %724 = vmatpush1.bf16.msra.mxu0 %v564
    %725 = vmatprep.subr.bf16.mxu0 0
    %726 = vmatpush1.bf16.msra.mxu0 %v565
    %727 = vmatprep.subr.bf16.mxu0 0
    %728 = vmatpush1.bf16.msra.mxu0 %v566
    %729 = vmatprep.subr.bf16.mxu0 0
    %730 = vmatpush1.bf16.msra.mxu0 %v567
    %731 = vmatprep.subr.bf16.mxu0 0
    %732 = vmatpush1.bf16.msra.mxu0 %v568
    %733 = vmatprep.subr.bf16.mxu0 0
    %734 = vmatpush1.bf16.msra.mxu0 %v569
    %735 = vmatprep.subr.bf16.mxu0 0
    %736 = vmatpush1.bf16.msra.mxu0 %v570
    %737 = vmatprep.subr.bf16.mxu0 0
    %738 = vmatpush1.bf16.msra.mxu0 %v571
    %739 = vmatprep.subr.bf16.mxu0 0
    %740 = vmatpush1.bf16.msra.mxu0 %v572
    %741 = vmatprep.mubr.bf16.mxu0 %v272
    %742 = vmatmul.mubr.bf16.gmra.mrb[0].mxu0 %v271
    %v743 = vpop.f32.mrb[0].mxu0
    %v744 = vadd.f32 %v704, %v743
    %v745 = vpop.f32.mrb[0].mxu0
    %v746 = vpop.f32.mrb[0].mxu0
    %v747 = vpop.f32.mrb[0].mxu0
    %748 = vdwg.mxu0
    %749 = vmatprep.subr.bf16.mxu0 0
    %750 = vmatpush1.bf16.msra.mxu0 %v573
    %751 = vmatprep.subr.bf16.mxu0 0
    %752 = vmatpush1.bf16.msra.mxu0 %v574
    %753 = vmatprep.subr.bf16.mxu0 0
    %754 = vmatpush1.bf16.msra.mxu0 %v575
    %755 = vmatprep.subr.bf16.mxu0 0
    %756 = vmatpush1.bf16.msra.mxu0 %v576
    %757 = vmatprep.subr.bf16.mxu0 0
    %758 = vmatpush1.bf16.msra.mxu0 %v577
    %759 = vmatprep.subr.bf16.mxu0 0
    %760 = vmatpush1.bf16.msra.mxu0 %v578
    %761 = vmatprep.subr.bf16.mxu0 0
    %762 = vmatpush1.bf16.msra.mxu0 %v579
    %763 = vmatprep.subr.bf16.mxu0 0
    %764 = vmatpush1.bf16.msra.mxu0 %v580
    %765 = vmatprep.subr.bf16.mxu0 0
    %766 = vmatpush1.bf16.msra.mxu0 %v581
    %767 = vmatprep.subr.bf16.mxu0 0
    %768 = vmatpush1.bf16.msra.mxu0 %v582
    %769 = vmatprep.subr.bf16.mxu0 0
    %770 = vmatpush1.bf16.msra.mxu0 %v583
    %771 = vmatprep.subr.bf16.mxu0 0
    %772 = vmatpush1.bf16.msra.mxu0 %v584
    %773 = vmatprep.subr.bf16.mxu0 0
    %774 = vmatpush1.bf16.msra.mxu0 %v585
    %775 = vmatprep.subr.bf16.mxu0 0
    %776 = vmatpush1.bf16.msra.mxu0 %v586
    %777 = vmatprep.subr.bf16.mxu0 0
    %778 = vmatpush1.bf16.msra.mxu0 %v587
    %779 = vmatprep.subr.bf16.mxu0 0
    %780 = vmatpush1.bf16.msra.mxu0 %v588
    %781 = vmatprep.mubr.bf16.mxu0 %v274
    %782 = vmatmul.mubr.bf16.gmra.mrb[0].mxu0 %v273
    %v783 = vpop.f32.mrb[0].mxu0
    %v784 = vadd.f32 %v744, %v783
    %v785 = vpop.f32.mrb[0].mxu0
    %v786 = vpop.f32.mrb[0].mxu0
    %v787 = vpop.f32.mrb[0].mxu0
    %788 = vdwg.mxu0
    %789 = vmatprep.subr.bf16.mxu0 0
    %790 = vmatpush1.bf16.msra.mxu0 %v589
    %791 = vmatprep.subr.bf16.mxu0 0
    %792 = vmatpush1.bf16.msra.mxu0 %v590
    %793 = vmatprep.subr.bf16.mxu0 0
    %794 = vmatpush1.bf16.msra.mxu0 %v591
    %795 = vmatprep.subr.bf16.mxu0 0
    %796 = vmatpush1.bf16.msra.mxu0 %v592
    %797 = vmatprep.subr.bf16.mxu0 0
    %798 = vmatpush1.bf16.msra.mxu0 %v593
    %799 = vmatprep.subr.bf16.mxu0 0
    %800 = vmatpush1.bf16.msra.mxu0 %v594
    %801 = vmatprep.subr.bf16.mxu0 0
    %802 = vmatpush1.bf16.msra.mxu0 %v595
    %803 = vmatprep.subr.bf16.mxu0 0
    %804 = vmatpush1.bf16.msra.mxu0 %v596
    %805 = vmatprep.subr.bf16.mxu0 0
    %806 = vmatpush1.bf16.msra.mxu0 %v597
    %807 = vmatprep.subr.bf16.mxu0 0
    %808 = vmatpush1.bf16.msra.mxu0 %v598
    %809 = vmatprep.subr.bf16.mxu0 0
    %810 = vmatpush1.bf16.msra.mxu0 %v599
    %811 = vmatprep.subr.bf16.mxu0 0
    %812 = vmatpush1.bf16.msra.mxu0 %v600
    %813 = vmatprep.subr.bf16.mxu0 0
    %814 = vmatpush1.bf16.msra.mxu0 %v601
    %815 = vmatprep.subr.bf16.mxu0 0
    %816 = vmatpush1.bf16.msra.mxu0 %v602
    %817 = vmatprep.subr.bf16.mxu0 0
    %818 = vmatpush1.bf16.msra.mxu0 %v603
    %819 = vmatprep.subr.bf16.mxu0 0
    %820 = vmatpush1.bf16.msra.mxu0 %v604
    %821 = vmatprep.mubr.bf16.mxu0 %v276
    %822 = vmatmul.mubr.bf16.gmra.mrb[0].mxu0 %v275
    %v823 = vpop.f32.mrb[0].mxu0
    %v824 = vadd.f32 %v784, %v823
    %v825 = vpop.f32.mrb[0].mxu0
    %v826 = vpop.f32.mrb[0].mxu0
    %v827 = vpop.f32.mrb[0].mxu0
    %828 = vdwg.mxu0
    %v829 = vmax.f32 %v824, 0.0
    %v830 = vpack.c.bf16 %v829, %v829
    %v831 = vld [vmem:[#allocation8] sm:$0xff]
    %v832 = vld [vmem:[#allocation8 + $0x8] sm:$0xff]
    %v833 = vld [vmem:[#allocation8 + $0x10] sm:$0xff]
    %v834 = vld [vmem:[#allocation8 + $0x18] sm:$0xff]
    %v835 = vld [vmem:[#allocation8 + $0x20] sm:$0xff]
    %v836 = vld [vmem:[#allocation8 + $0x28] sm:$0xff]
    %v837 = vld [vmem:[#allocation8 + $0x30] sm:$0xff]
    %v838 = vld [vmem:[#allocation8 + $0x38] sm:$0xff]
    %v839 = vld [vmem:[#allocation8 + $0x40] sm:$0xff]
    %v840 = vld [vmem:[#allocation8 + $0x48] sm:$0xff]
    %v841 = vld [vmem:[#allocation8 + $0x50] sm:$0xff]
    %v842 = vld [vmem:[#allocation8 + $0x58] sm:$0xff]
    %v843 = vld [vmem:[#allocation8 + $0x60] sm:$0xff]
    %v844 = vld [vmem:[#allocation8 + $0x68] sm:$0xff]
    %v845 = vld [vmem:[#allocation8 + $0x70] sm:$0xff]
    %v846 = vld [vmem:[#allocation8 + $0x78] sm:$0xff]
    %v847 = vld [vmem:[%s5] sm:$0x3]
    %v849 = vlaneseq
    %v850 = vshrl.u32 %v849, 7
    %v851 = vsub.s32 0, %v850
    %v852 = vrot.slane %v847, %v851
    %v853 = vlaneseq
    %v854 = vshrl.u32 %v853, 7
    %v855 = vsub.s32 1, %v854
    %v856 = vrot.slane %v847, %v855
    %v875 = vunpack.c.l.b16 %v831
    %v876 = vunpack.c.h.b16 %v831
    %v877 = vunpack.c.l.b16 %v832
    %v878 = vunpack.c.h.b16 %v832
    %v879 = vunpack.c.l.b16 %v833
    %v880 = vunpack.c.h.b16 %v833
    %v881 = vunpack.c.l.b16 %v834
    %v882 = vunpack.c.h.b16 %v834
    %v883 = vunpack.c.l.b16 %v835
    %v884 = vunpack.c.h.b16 %v835
    %v885 = vunpack.c.l.b16 %v836
    %v886 = vunpack.c.h.b16 %v836
    %v887 = vunpack.c.l.b16 %v837
    %v888 = vunpack.c.h.b16 %v837
    %v889 = vunpack.c.l.b16 %v838
    %v890 = vunpack.c.h.b16 %v838
    %v891 = vunpack.c.l.b16 %v839
    %v892 = vunpack.c.h.b16 %v839
    %v893 = vunpack.c.l.b16 %v840
    %v894 = vunpack.c.h.b16 %v840
    %v895 = vunpack.c.l.b16 %v841
    %v896 = vunpack.c.h.b16 %v841
    %v897 = vunpack.c.l.b16 %v842
    %v898 = vunpack.c.h.b16 %v842
    %v899 = vunpack.c.l.b16 %v843
    %v900 = vunpack.c.h.b16 %v843
    %v901 = vunpack.c.l.b16 %v844
    %v902 = vunpack.c.h.b16 %v844
    %v903 = vunpack.c.l.b16 %v845
    %v904 = vunpack.c.h.b16 %v845
    %v905 = vunpack.c.l.b16 %v846
    %v906 = vunpack.c.h.b16 %v846
    %v907 = vpack.c.b16 %v877, %v875
    %v908 = vpack.c.b16 %v878, %v876
    %v909 = vpack.c.b16 %v881, %v879
    %v910 = vpack.c.b16 %v882, %v880
    %v911 = vpack.c.b16 %v885, %v883
    %v912 = vpack.c.b16 %v886, %v884
    %v913 = vpack.c.b16 %v889, %v887
    %v914 = vpack.c.b16 %v890, %v888
    %v915 = vpack.c.b16 %v893, %v891
    %v916 = vpack.c.b16 %v894, %v892
    %v917 = vpack.c.b16 %v897, %v895
    %v918 = vpack.c.b16 %v898, %v896
    %v919 = vpack.c.b16 %v901, %v899
    %v920 = vpack.c.b16 %v902, %v900
    %v921 = vpack.c.b16 %v905, %v903
    %v922 = vpack.c.b16 %v906, %v904
    %939 = vmatprep.subr.bf16.mxu0 %v908
    %940 = vmatpush1.bf16.msra.mxu0 %v907
    %941 = vmatprep.subr.bf16.mxu0 %v910
    %942 = vmatpush1.bf16.msra.mxu0 %v909
    %943 = vmatprep.subr.bf16.mxu0 %v912
    %944 = vmatpush1.bf16.msra.mxu0 %v911
    %945 = vmatprep.subr.bf16.mxu0 %v914
    %946 = vmatpush1.bf16.msra.mxu0 %v913
    %947 = vmatprep.subr.bf16.mxu0 %v916
    %948 = vmatpush1.bf16.msra.mxu0 %v915
    %949 = vmatprep.subr.bf16.mxu0 %v918
    %950 = vmatpush1.bf16.msra.mxu0 %v917
    %951 = vmatprep.subr.bf16.mxu0 %v920
    %952 = vmatpush1.bf16.msra.mxu0 %v919
    %953 = vmatprep.subr.bf16.mxu0 %v922
    %954 = vmatpush1.bf16.msra.mxu0 %v921
    %955 = vmatprep.subr.bf16.mxu0 0
    %956 = vmatpush1.bf16.msra.mxu0 0
    %957 = vmatprep.subr.bf16.mxu0 0
    %958 = vmatpush1.bf16.msra.mxu0 0
    %959 = vmatprep.subr.bf16.mxu0 0
    %960 = vmatpush1.bf16.msra.mxu0 0
    %961 = vmatprep.subr.bf16.mxu0 0
    %962 = vmatpush1.bf16.msra.mxu0 0
    %963 = vmatprep.subr.bf16.mxu0 0
    %964 = vmatpush1.bf16.msra.mxu0 0
    %965 = vmatprep.subr.bf16.mxu0 0
    %966 = vmatpush1.bf16.msra.mxu0 0
    %967 = vmatprep.subr.bf16.mxu0 0
    %968 = vmatpush1.bf16.msra.mxu0 0
    %969 = vmatprep.subr.bf16.mxu0 0
    %970 = vmatpush1.bf16.msra.mxu0 0
    %971 = vmatprep.mubr.bf16.mxu0 0
    %972 = vmatmul.mubr.bf16.gmra.mrb[0].mxu0 %v830
    %v973 = vpop.f32.mrb[0].mxu0
    %v974 = vadd.f32 %v852, %v973
    %v975 = vpop.f32.mrb[0].mxu0
    %v976 = vadd.f32 %v856, %v975
    %v977 = vpop.f32.mrb[0].mxu0
    %v978 = vpop.f32.mrb[0].mxu0
    %979 = vdwg.mxu0
    %980 = vst [vmem:[#allocation14] sm:$0xff] %v974
    %981 = vst [vmem:[#allocation14 + $0x8] sm:$0xff] %v976
    %v982 = vld [vmem:[#allocation5] sm:$0xff]
    %v983 = vmul.f32 %v976, 0.5
    %v984 = vmul.f32 %v983, 1.442695
    %v985 = vpow.pop %v984
    %v986 = vmul.f32 %v982, %v985
    %v987 = vadd.f32 %v974, %v986
    %v988 = vpack.c.bf16 %v987, %v987
    %v989 = vld [vmem:[#allocation10] sm:$0xf]
    %v990 = vld [vmem:[#allocation10 + $0x4] sm:$0xf]
    %v991 = vld [vmem:[#allocation10 + $0x8] sm:$0xf]
    %v992 = vld [vmem:[#allocation10 + $0xc] sm:$0xf]
    %v993 = vld [vmem:[#allocation10 + $0x10] sm:$0xf]
    %v994 = vld [vmem:[#allocation10 + $0x14] sm:$0xf]
    %v995 = vld [vmem:[#allocation10 + $0x18] sm:$0xf]
    %v996 = vld [vmem:[#allocation10 + $0x1c] sm:$0xf]
    %v997 = vld [vmem:[#allocation10 + $0x20] sm:$0xf]
    %v998 = vld [vmem:[#allocation10 + $0x24] sm:$0xf]
    %v999 = vld [vmem:[#allocation10 + $0x28] sm:$0xf]
    %v1000 = vld [vmem:[#allocation10 + $0x2c] sm:$0xf]
    %v1001 = vld [vmem:[#allocation10 + $0x30] sm:$0xf]
    %v1002 = vld [vmem:[#allocation10 + $0x34] sm:$0xf]
    %v1003 = vld [vmem:[#allocation10 + $0x38] sm:$0xf]
    %v1004 = vld [vmem:[#allocation10 + $0x3c] sm:$0xf]
    %v1005 = vld [vmem:[%s7] sm:$0x1]
    %v1007 = vlaneseq
    %v1008 = vshrl.u32 %v1007, 7
    %v1009 = vsub.s32 0, %v1008
    %v1010 = vrot.slane %v1005, %v1009
    %v1028 = vunpack.c.l.b16 %v989
    %v1029 = vunpack.c.l.b16 %v990
    %v1030 = vunpack.c.l.b16 %v991
    %v1031 = vunpack.c.l.b16 %v992
    %v1032 = vunpack.c.l.b16 %v993
    %v1033 = vunpack.c.l.b16 %v994
    %v1034 = vunpack.c.l.b16 %v995
    %v1035 = vunpack.c.l.b16 %v996
    %v1036 = vunpack.c.l.b16 %v997
    %v1037 = vunpack.c.l.b16 %v998
    %v1038 = vunpack.c.l.b16 %v999
    %v1039 = vunpack.c.l.b16 %v1000
    %v1040 = vunpack.c.l.b16 %v1001
    %v1041 = vunpack.c.l.b16 %v1002
    %v1042 = vunpack.c.l.b16 %v1003
    %v1043 = vunpack.c.l.b16 %v1004
    %v1044 = vpack.c.b16 %v1029, %v1028
    %v1045 = vpack.c.b16 %v1031, %v1030
    %v1046 = vpack.c.b16 %v1033, %v1032
    %v1047 = vpack.c.b16 %v1035, %v1034
    %v1048 = vpack.c.b16 %v1037, %v1036
    %v1049 = vpack.c.b16 %v1039, %v1038
    %v1050 = vpack.c.b16 %v1041, %v1040
    %v1051 = vpack.c.b16 %v1043, %v1042
    %1060 = vmatprep.subr.bf16.mxu0 0
    %1061 = vmatpush1.bf16.msra.mxu0 %v1044
    %1062 = vmatprep.subr.bf16.mxu0 0
    %1063 = vmatpush1.bf16.msra.mxu0 %v1045
    %1064 = vmatprep.subr.bf16.mxu0 0
    %1065 = vmatpush1.bf16.msra.mxu0 %v1046
    %1066 = vmatprep.subr.bf16.mxu0 0
    %1067 = vmatpush1.bf16.msra.mxu0 %v1047
    %1068 = vmatprep.subr.bf16.mxu0 0
    %1069 = vmatpush1.bf16.msra.mxu0 %v1048
    %1070 = vmatprep.subr.bf16.mxu0 0
    %1071 = vmatpush1.bf16.msra.mxu0 %v1049
    %1072 = vmatprep.subr.bf16.mxu0 0
    %1073 = vmatpush1.bf16.msra.mxu0 %v1050
    %1074 = vmatprep.subr.bf16.mxu0 0
    %1075 = vmatpush1.bf16.msra.mxu0 %v1051
    %1076 = vmatprep.subr.bf16.mxu0 0
    %1077 = vmatpush1.bf16.msra.mxu0 0
    %1078 = vmatprep.subr.bf16.mxu0 0
    %1079 = vmatpush1.bf16.msra.mxu0 0
    %1080 = vmatprep.subr.bf16.mxu0 0
    %1081 = vmatpush1.bf16.msra.mxu0 0
    %1082 = vmatprep.subr.bf16.mxu0 0
    %1083 = vmatpush1.bf16.msra.mxu0 0
    %1084 = vmatprep.subr.bf16.mxu0 0
    %1085 = vmatpush1.bf16.msra.mxu0 0
    %1086 = vmatprep.subr.bf16.mxu0 0
    %1087 = vmatpush1.bf16.msra.mxu0 0
    %1088 = vmatprep.subr.bf16.mxu0 0
    %1089 = vmatpush1.bf16.msra.mxu0 0
    %1090 = vmatprep.subr.bf16.mxu0 0
    %1091 = vmatpush1.bf16.msra.mxu0 0
    %1092 = vmatprep.mubr.bf16.mxu0 0
    %1093 = vmatmul.mubr.bf16.gmra.mrb[0].mxu0 %v988
    %v1094 = vpop.f32.mrb[0].mxu0
    %v1095 = vadd.f32 %v1010, %v1094
    %v1096 = vpop.f32.mrb[0].mxu0
    %v1097 = vpop.f32.mrb[0].mxu0
    %v1098 = vpop.f32.mrb[0].mxu0
    %1099 = vdwg.mxu0
    %v1100 = vmax.f32 %v1095, 0.0
    %v1101 = vpack.c.bf16 %v1100, %v1100
    %v1102 = vld [vmem:[#allocation11] sm:$0xff]
    %v1103 = vld [vmem:[#allocation11 + $0x8] sm:$0xff]
    %v1104 = vld [vmem:[#allocation11 + $0x10] sm:$0xff]
    %v1105 = vld [vmem:[#allocation11 + $0x18] sm:$0xff]
    %v1106 = vld [vmem:[#allocation11 + $0x20] sm:$0xff]
    %v1107 = vld [vmem:[#allocation11 + $0x28] sm:$0xff]
    %v1108 = vld [vmem:[#allocation11 + $0x30] sm:$0xff]
    %v1109 = vld [vmem:[#allocation11 + $0x38] sm:$0xff]
    %v1110 = vld [vmem:[#allocation11 + $0x40] sm:$0xff]
    %v1111 = vld [vmem:[#allocation11 + $0x48] sm:$0xff]
    %v1112 = vld [vmem:[#allocation11 + $0x50] sm:$0xff]
    %v1113 = vld [vmem:[#allocation11 + $0x58] sm:$0xff]
    %v1114 = vld [vmem:[#allocation11 + $0x60] sm:$0xff]
    %v1115 = vld [vmem:[#allocation11 + $0x68] sm:$0xff]
    %v1116 = vld [vmem:[#allocation11 + $0x70] sm:$0xff]
    %v1117 = vld [vmem:[#allocation11 + $0x78] sm:$0xff]
    %v1118 = vld [vmem:[#allocation11 + $0x80] sm:$0xff]
    %v1119 = vld [vmem:[#allocation11 + $0x88] sm:$0xff]
    %v1120 = vld [vmem:[#allocation11 + $0x90] sm:$0xff]
    %v1121 = vld [vmem:[#allocation11 + $0x98] sm:$0xff]
    %v1122 = vld [vmem:[#allocation11 + $0xa0] sm:$0xff]
    %v1123 = vld [vmem:[#allocation11 + $0xa8] sm:$0xff]
    %v1124 = vld [vmem:[#allocation11 + $0xb0] sm:$0xff]
    %v1125 = vld [vmem:[#allocation11 + $0xb8] sm:$0xff]
    %v1126 = vld [vmem:[#allocation11 + $0xc0] sm:$0xff]
    %v1127 = vld [vmem:[#allocation11 + $0xc8] sm:$0xff]
    %v1128 = vld [vmem:[#allocation11 + $0xd0] sm:$0xff]
    %v1129 = vld [vmem:[#allocation11 + $0xd8] sm:$0xff]
    %v1130 = vld [vmem:[#allocation11 + $0xe0] sm:$0xff]
    %v1131 = vld [vmem:[#allocation11 + $0xe8] sm:$0xff]
    %v1132 = vld [vmem:[#allocation11 + $0xf0] sm:$0xff]
    %v1133 = vld [vmem:[#allocation11 + $0xf8] sm:$0xff]
    %v1134 = vld [vmem:[#allocation11 + $0x100] sm:$0xff]
    %v1135 = vld [vmem:[#allocation11 + $0x108] sm:$0xff]
    %v1136 = vld [vmem:[#allocation11 + $0x110] sm:$0xff]
    %v1137 = vld [vmem:[#allocation11 + $0x118] sm:$0xff]
    %v1138 = vld [vmem:[#allocation11 + $0x120] sm:$0xff]
    %v1139 = vld [vmem:[#allocation11 + $0x128] sm:$0xff]
    %v1140 = vld [vmem:[#allocation11 + $0x130] sm:$0xff]
    %v1141 = vld [vmem:[#allocation11 + $0x138] sm:$0xff]
    %v1142 = vld [vmem:[#allocation11 + $0x140] sm:$0xff]
    %v1143 = vld [vmem:[#allocation11 + $0x148] sm:$0xff]
    %v1144 = vld [vmem:[#allocation11 + $0x150] sm:$0xff]
    %v1145 = vld [vmem:[#allocation11 + $0x158] sm:$0xff]
    %v1146 = vld [vmem:[#allocation11 + $0x160] sm:$0xff]
    %v1147 = vld [vmem:[#allocation11 + $0x168] sm:$0xff]
    %v1148 = vld [vmem:[#allocation11 + $0x170] sm:$0xff]
    %v1149 = vld [vmem:[#allocation11 + $0x178] sm:$0xff]
    %v1150 = vld [vmem:[#allocation11 + $0x180] sm:$0xff]
    %v1151 = vld [vmem:[#allocation11 + $0x188] sm:$0xff]
    %v1152 = vld [vmem:[#allocation11 + $0x190] sm:$0xff]
    %v1153 = vld [vmem:[#allocation11 + $0x198] sm:$0xff]
    %v1154 = vld [vmem:[#allocation11 + $0x1a0] sm:$0xff]
    %v1155 = vld [vmem:[#allocation11 + $0x1a8] sm:$0xff]
    %v1156 = vld [vmem:[#allocation11 + $0x1b0] sm:$0xff]
    %v1157 = vld [vmem:[#allocation11 + $0x1b8] sm:$0xff]
    %v1158 = vld [vmem:[#allocation11 + $0x1c0] sm:$0xff]
    %v1159 = vld [vmem:[#allocation11 + $0x1c8] sm:$0xff]
    %v1160 = vld [vmem:[#allocation11 + $0x1d0] sm:$0xff]
    %v1161 = vld [vmem:[#allocation11 + $0x1d8] sm:$0xff]
    %v1162 = vld [vmem:[#allocation11 + $0x1e0] sm:$0xff]
    %v1163 = vld [vmem:[#allocation11 + $0x1e8] sm:$0xff]
    %v1164 = vld [vmem:[#allocation11 + $0x1f0] sm:$0xff]
    %v1165 = vld [vmem:[#allocation11 + $0x1f8] sm:$0xff]
    %v1166 = vld [vmem:[%s9] sm:$0xff]
    %v1168 = vlaneseq
    %v1169 = vshrl.u32 %v1168, 7
    %v1170 = vsub.s32 0, %v1169
    %v1171 = vrot.slane %v1166, %v1170
    %v1172 = vlaneseq
    %v1173 = vshrl.u32 %v1172, 7
    %v1174 = vsub.s32 1, %v1173
    %v1175 = vrot.slane %v1166, %v1174
    %v1176 = vlaneseq
    %v1177 = vshrl.u32 %v1176, 7
    %v1178 = vsub.s32 2, %v1177
    %v1179 = vrot.slane %v1166, %v1178
    %v1180 = vlaneseq
    %v1181 = vshrl.u32 %v1180, 7
    %v1182 = vsub.s32 3, %v1181
    %v1183 = vrot.slane %v1166, %v1182
    %v1184 = vlaneseq
    %v1185 = vshrl.u32 %v1184, 7
    %v1186 = vsub.s32 4, %v1185
    %v1187 = vrot.slane %v1166, %v1186
    %v1188 = vlaneseq
    %v1189 = vshrl.u32 %v1188, 7
    %v1190 = vsub.s32 5, %v1189
    %v1191 = vrot.slane %v1166, %v1190
    %v1192 = vlaneseq
    %v1193 = vshrl.u32 %v1192, 7
    %v1194 = vsub.s32 6, %v1193
    %v1195 = vrot.slane %v1166, %v1194
    %v1196 = vlaneseq
    %v1197 = vshrl.u32 %v1196, 7
    %v1198 = vsub.s32 7, %v1197
    %v1199 = vrot.slane %v1166, %v1198
    %v1272 = vunpack.c.l.b16 %v1102
    %v1273 = vunpack.c.h.b16 %v1102
    %v1274 = vunpack.c.l.b16 %v1103
    %v1275 = vunpack.c.h.b16 %v1103
    %v1276 = vunpack.c.l.b16 %v1104
    %v1277 = vunpack.c.h.b16 %v1104
    %v1278 = vunpack.c.l.b16 %v1105
    %v1279 = vunpack.c.h.b16 %v1105
    %v1280 = vunpack.c.l.b16 %v1106
    %v1281 = vunpack.c.h.b16 %v1106
    %v1282 = vunpack.c.l.b16 %v1107
    %v1283 = vunpack.c.h.b16 %v1107
    %v1284 = vunpack.c.l.b16 %v1108
    %v1285 = vunpack.c.h.b16 %v1108
    %v1286 = vunpack.c.l.b16 %v1109
    %v1287 = vunpack.c.h.b16 %v1109
    %v1288 = vunpack.c.l.b16 %v1110
    %v1289 = vunpack.c.h.b16 %v1110
    %v1290 = vunpack.c.l.b16 %v1111
    %v1291 = vunpack.c.h.b16 %v1111
    %v1292 = vunpack.c.l.b16 %v1112
    %v1293 = vunpack.c.h.b16 %v1112
    %v1294 = vunpack.c.l.b16 %v1113
    %v1295 = vunpack.c.h.b16 %v1113
    %v1296 = vunpack.c.l.b16 %v1114
    %v1297 = vunpack.c.h.b16 %v1114
    %v1298 = vunpack.c.l.b16 %v1115
    %v1299 = vunpack.c.h.b16 %v1115
    %v1300 = vunpack.c.l.b16 %v1116
    %v1301 = vunpack.c.h.b16 %v1116
    %v1302 = vunpack.c.l.b16 %v1117
    %v1303 = vunpack.c.h.b16 %v1117
    %v1304 = vunpack.c.l.b16 %v1118
    %v1305 = vunpack.c.h.b16 %v1118
    %v1306 = vunpack.c.l.b16 %v1119
    %v1307 = vunpack.c.h.b16 %v1119
    %v1308 = vunpack.c.l.b16 %v1120
    %v1309 = vunpack.c.h.b16 %v1120
    %v1310 = vunpack.c.l.b16 %v1121
    %v1311 = vunpack.c.h.b16 %v1121
    %v1312 = vunpack.c.l.b16 %v1122
    %v1313 = vunpack.c.h.b16 %v1122
    %v1314 = vunpack.c.l.b16 %v1123
    %v1315 = vunpack.c.h.b16 %v1123
    %v1316 = vunpack.c.l.b16 %v1124
    %v1317 = vunpack.c.h.b16 %v1124
    %v1318 = vunpack.c.l.b16 %v1125
    %v1319 = vunpack.c.h.b16 %v1125
    %v1320 = vunpack.c.l.b16 %v1126
    %v1321 = vunpack.c.h.b16 %v1126
    %v1322 = vunpack.c.l.b16 %v1127
    %v1323 = vunpack.c.h.b16 %v1127
    %v1324 = vunpack.c.l.b16 %v1128
    %v1325 = vunpack.c.h.b16 %v1128
    %v1326 = vunpack.c.l.b16 %v1129
    %v1327 = vunpack.c.h.b16 %v1129
    %v1328 = vunpack.c.l.b16 %v1130
    %v1329 = vunpack.c.h.b16 %v1130
    %v1330 = vunpack.c.l.b16 %v1131
    %v1331 = vunpack.c.h.b16 %v1131
    %v1332 = vunpack.c.l.b16 %v1132
    %v1333 = vunpack.c.h.b16 %v1132
    %v1334 = vunpack.c.l.b16 %v1133
    %v1335 = vunpack.c.h.b16 %v1133
    %v1336 = vunpack.c.l.b16 %v1134
    %v1337 = vunpack.c.h.b16 %v1134
    %v1338 = vunpack.c.l.b16 %v1135
    %v1339 = vunpack.c.h.b16 %v1135
    %v1340 = vunpack.c.l.b16 %v1136
    %v1341 = vunpack.c.h.b16 %v1136
    %v1342 = vunpack.c.l.b16 %v1137
    %v1343 = vunpack.c.h.b16 %v1137
    %v1344 = vunpack.c.l.b16 %v1138
    %v1345 = vunpack.c.h.b16 %v1138
    %v1346 = vunpack.c.l.b16 %v1139
    %v1347 = vunpack.c.h.b16 %v1139
    %v1348 = vunpack.c.l.b16 %v1140
    %v1349 = vunpack.c.h.b16 %v1140
    %v1350 = vunpack.c.l.b16 %v1141
    %v1351 = vunpack.c.h.b16 %v1141
    %v1352 = vunpack.c.l.b16 %v1142
    %v1353 = vunpack.c.h.b16 %v1142
    %v1354 = vunpack.c.l.b16 %v1143
    %v1355 = vunpack.c.h.b16 %v1143
    %v1356 = vunpack.c.l.b16 %v1144
    %v1357 = vunpack.c.h.b16 %v1144
    %v1358 = vunpack.c.l.b16 %v1145
    %v1359 = vunpack.c.h.b16 %v1145
    %v1360 = vunpack.c.l.b16 %v1146
    %v1361 = vunpack.c.h.b16 %v1146
    %v1362 = vunpack.c.l.b16 %v1147
    %v1363 = vunpack.c.h.b16 %v1147
    %v1364 = vunpack.c.l.b16 %v1148
    %v1365 = vunpack.c.h.b16 %v1148
    %v1366 = vunpack.c.l.b16 %v1149
    %v1367 = vunpack.c.h.b16 %v1149
    %v1368 = vunpack.c.l.b16 %v1150
    %v1369 = vunpack.c.h.b16 %v1150
    %v1370 = vunpack.c.l.b16 %v1151
    %v1371 = vunpack.c.h.b16 %v1151
    %v1372 = vunpack.c.l.b16 %v1152
    %v1373 = vunpack.c.h.b16 %v1152
    %v1374 = vunpack.c.l.b16 %v1153
    %v1375 = vunpack.c.h.b16 %v1153
    %v1376 = vunpack.c.l.b16 %v1154
    %v1377 = vunpack.c.h.b16 %v1154
    %v1378 = vunpack.c.l.b16 %v1155
    %v1379 = vunpack.c.h.b16 %v1155
    %v1380 = vunpack.c.l.b16 %v1156
    %v1381 = vunpack.c.h.b16 %v1156
    %v1382 = vunpack.c.l.b16 %v1157
    %v1383 = vunpack.c.h.b16 %v1157
    %v1384 = vunpack.c.l.b16 %v1158
    %v1385 = vunpack.c.h.b16 %v1158
    %v1386 = vunpack.c.l.b16 %v1159
    %v1387 = vunpack.c.h.b16 %v1159
    %v1388 = vunpack.c.l.b16 %v1160
    %v1389 = vunpack.c.h.b16 %v1160
    %v1390 = vunpack.c.l.b16 %v1161
    %v1391 = vunpack.c.h.b16 %v1161
    %v1392 = vunpack.c.l.b16 %v1162
    %v1393 = vunpack.c.h.b16 %v1162
    %v1394 = vunpack.c.l.b16 %v1163
    %v1395 = vunpack.c.h.b16 %v1163
    %v1396 = vunpack.c.l.b16 %v1164
    %v1397 = vunpack.c.h.b16 %v1164
    %v1398 = vunpack.c.l.b16 %v1165
    %v1399 = vunpack.c.h.b16 %v1165
    %v1400 = vpack.c.b16 %v1280, %v1272
    %v1401 = vpack.c.b16 %v1281, %v1273
    %v1402 = vpack.c.b16 %v1282, %v1274
    %v1403 = vpack.c.b16 %v1283, %v1275
    %v1404 = vpack.c.b16 %v1284, %v1276
    %v1405 = vpack.c.b16 %v1285, %v1277
    %v1406 = vpack.c.b16 %v1286, %v1278
    %v1407 = vpack.c.b16 %v1287, %v1279
    %v1408 = vpack.c.b16 %v1296, %v1288
    %v1409 = vpack.c.b16 %v1297, %v1289
    %v1410 = vpack.c.b16 %v1298, %v1290
    %v1411 = vpack.c.b16 %v1299, %v1291
    %v1412 = vpack.c.b16 %v1300, %v1292
    %v1413 = vpack.c.b16 %v1301, %v1293
    %v1414 = vpack.c.b16 %v1302, %v1294
    %v1415 = vpack.c.b16 %v1303, %v1295
    %v1416 = vpack.c.b16 %v1312, %v1304
    %v1417 = vpack.c.b16 %v1313, %v1305
    %v1418 = vpack.c.b16 %v1314, %v1306
    %v1419 = vpack.c.b16 %v1315, %v1307
    %v1420 = vpack.c.b16 %v1316, %v1308
    %v1421 = vpack.c.b16 %v1317, %v1309
    %v1422 = vpack.c.b16 %v1318, %v1310
    %v1423 = vpack.c.b16 %v1319, %v1311
    %v1424 = vpack.c.b16 %v1328, %v1320
    %v1425 = vpack.c.b16 %v1329, %v1321
    %v1426 = vpack.c.b16 %v1330, %v1322
    %v1427 = vpack.c.b16 %v1331, %v1323
    %v1428 = vpack.c.b16 %v1332, %v1324
    %v1429 = vpack.c.b16 %v1333, %v1325
    %v1430 = vpack.c.b16 %v1334, %v1326
    %v1431 = vpack.c.b16 %v1335, %v1327
    %v1432 = vpack.c.b16 %v1344, %v1336
    %v1433 = vpack.c.b16 %v1345, %v1337
    %v1434 = vpack.c.b16 %v1346, %v1338
    %v1435 = vpack.c.b16 %v1347, %v1339
    %v1436 = vpack.c.b16 %v1348, %v1340
    %v1437 = vpack.c.b16 %v1349, %v1341
    %v1438 = vpack.c.b16 %v1350, %v1342
    %v1439 = vpack.c.b16 %v1351, %v1343
    %v1440 = vpack.c.b16 %v1360, %v1352
    %v1441 = vpack.c.b16 %v1361, %v1353
    %v1442 = vpack.c.b16 %v1362, %v1354
    %v1443 = vpack.c.b16 %v1363, %v1355
    %v1444 = vpack.c.b16 %v1364, %v1356
    %v1445 = vpack.c.b16 %v1365, %v1357
    %v1446 = vpack.c.b16 %v1366, %v1358
    %v1447 = vpack.c.b16 %v1367, %v1359
    %v1448 = vpack.c.b16 %v1376, %v1368
    %v1449 = vpack.c.b16 %v1377, %v1369
    %v1450 = vpack.c.b16 %v1378, %v1370
    %v1451 = vpack.c.b16 %v1379, %v1371
    %v1452 = vpack.c.b16 %v1380, %v1372
    %v1453 = vpack.c.b16 %v1381, %v1373
    %v1454 = vpack.c.b16 %v1382, %v1374
    %v1455 = vpack.c.b16 %v1383, %v1375
    %v1456 = vpack.c.b16 %v1392, %v1384
    %v1457 = vpack.c.b16 %v1393, %v1385
    %v1458 = vpack.c.b16 %v1394, %v1386
    %v1459 = vpack.c.b16 %v1395, %v1387
    %v1460 = vpack.c.b16 %v1396, %v1388
    %v1461 = vpack.c.b16 %v1397, %v1389
    %v1462 = vpack.c.b16 %v1398, %v1390
    %v1463 = vpack.c.b16 %v1399, %v1391
    %1528 = vmatprep.subr.bf16.mxu0 %v1401
    %1529 = vmatpush1.bf16.msra.mxu0 %v1400
    %1530 = vmatprep.subr.bf16.mxu0 %v1409
    %1531 = vmatpush1.bf16.msra.mxu0 %v1408
    %1532 = vmatprep.subr.bf16.mxu0 %v1417
    %1533 = vmatpush1.bf16.msra.mxu0 %v1416
    %1534 = vmatprep.subr.bf16.mxu0 %v1425
    %1535 = vmatpush1.bf16.msra.mxu0 %v1424
    %1536 = vmatprep.subr.bf16.mxu0 %v1433
    %1537 = vmatpush1.bf16.msra.mxu0 %v1432
    %1538 = vmatprep.subr.bf16.mxu0 %v1441
    %1539 = vmatpush1.bf16.msra.mxu0 %v1440
    %1540 = vmatprep.subr.bf16.mxu0 %v1449
    %1541 = vmatpush1.bf16.msra.mxu0 %v1448
    %1542 = vmatprep.subr.bf16.mxu0 %v1457
    %1543 = vmatpush1.bf16.msra.mxu0 %v1456
    %1544 = vmatprep.subr.bf16.mxu0 0
    %1545 = vmatpush1.bf16.msra.mxu0 0
    %1546 = vmatprep.subr.bf16.mxu0 0
    %1547 = vmatpush1.bf16.msra.mxu0 0
    %1548 = vmatprep.subr.bf16.mxu0 0
    %1549 = vmatpush1.bf16.msra.mxu0 0
    %1550 = vmatprep.subr.bf16.mxu0 0
    %1551 = vmatpush1.bf16.msra.mxu0 0
    %1552 = vmatprep.subr.bf16.mxu0 0
    %1553 = vmatpush1.bf16.msra.mxu0 0
    %1554 = vmatprep.subr.bf16.mxu0 0
    %1555 = vmatpush1.bf16.msra.mxu0 0
    %1556 = vmatprep.subr.bf16.mxu0 0
    %1557 = vmatpush1.bf16.msra.mxu0 0
    %1558 = vmatprep.subr.bf16.mxu0 0
    %1559 = vmatpush1.bf16.msra.mxu0 0
    %1560 = vmatprep.mubr.bf16.mxu0 0
    %1561 = vmatmul.mubr.bf16.gmra.mrb[0].mxu0 %v1101
    %v1562 = vpop.f32.mrb[0].mxu0
    %v1563 = vadd.f32 %v1171, %v1562
    %v1564 = vpop.f32.mrb[0].mxu0
    %v1565 = vadd.f32 %v1175, %v1564
    %v1566 = vpop.f32.mrb[0].mxu0
    %v1567 = vpop.f32.mrb[0].mxu0
    %1568 = vdwg.mxu0
    %1569 = vmatprep.subr.bf16.mxu0 %v1403
    %1570 = vmatpush1.bf16.msra.mxu0 %v1402
    %1571 = vmatprep.subr.bf16.mxu0 %v1411
    %1572 = vmatpush1.bf16.msra.mxu0 %v1410
    %1573 = vmatprep.subr.bf16.mxu0 %v1419
    %1574 = vmatpush1.bf16.msra.mxu0 %v1418
    %1575 = vmatprep.subr.bf16.mxu0 %v1427
    %1576 = vmatpush1.bf16.msra.mxu0 %v1426
    %1577 = vmatprep.subr.bf16.mxu0 %v1435
    %1578 = vmatpush1.bf16.msra.mxu0 %v1434
    %1579 = vmatprep.subr.bf16.mxu0 %v1443
    %1580 = vmatpush1.bf16.msra.mxu0 %v1442
    %1581 = vmatprep.subr.bf16.mxu0 %v1451
    %1582 = vmatpush1.bf16.msra.mxu0 %v1450
    %1583 = vmatprep.subr.bf16.mxu0 %v1459
    %1584 = vmatpush1.bf16.msra.mxu0 %v1458
    %1585 = vmatprep.subr.bf16.mxu0 0
    %1586 = vmatpush1.bf16.msra.mxu0 0
    %1587 = vmatprep.subr.bf16.mxu0 0
    %1588 = vmatpush1.bf16.msra.mxu0 0
    %1589 = vmatprep.subr.bf16.mxu0 0
    %1590 = vmatpush1.bf16.msra.mxu0 0
    %1591 = vmatprep.subr.bf16.mxu0 0
    %1592 = vmatpush1.bf16.msra.mxu0 0
    %1593 = vmatprep.subr.bf16.mxu0 0
    %1594 = vmatpush1.bf16.msra.mxu0 0
    %1595 = vmatprep.subr.bf16.mxu0 0
    %1596 = vmatpush1.bf16.msra.mxu0 0
    %1597 = vmatprep.subr.bf16.mxu0 0
    %1598 = vmatpush1.bf16.msra.mxu0 0
    %1599 = vmatprep.subr.bf16.mxu0 0
    %1600 = vmatpush1.bf16.msra.mxu0 0
    %1601 = vmatprep.mubr.bf16.mxu0 0
    %1602 = vmatmul.mubr.bf16.gmra.mrb[0].mxu0 %v1101
    %v1603 = vpop.f32.mrb[0].mxu0
    %v1604 = vadd.f32 %v1179, %v1603
    %v1605 = vpop.f32.mrb[0].mxu0
    %v1606 = vadd.f32 %v1183, %v1605
    %v1607 = vpop.f32.mrb[0].mxu0
    %v1608 = vpop.f32.mrb[0].mxu0
    %1609 = vdwg.mxu0
    %1610 = vmatprep.subr.bf16.mxu0 %v1405
    %1611 = vmatpush1.bf16.msra.mxu0 %v1404
    %1612 = vmatprep.subr.bf16.mxu0 %v1413
    %1613 = vmatpush1.bf16.msra.mxu0 %v1412
    %1614 = vmatprep.subr.bf16.mxu0 %v1421
    %1615 = vmatpush1.bf16.msra.mxu0 %v1420
    %1616 = vmatprep.subr.bf16.mxu0 %v1429
    %1617 = vmatpush1.bf16.msra.mxu0 %v1428
    %1618 = vmatprep.subr.bf16.mxu0 %v1437
    %1619 = vmatpush1.bf16.msra.mxu0 %v1436
    %1620 = vmatprep.subr.bf16.mxu0 %v1445
    %1621 = vmatpush1.bf16.msra.mxu0 %v1444
    %1622 = vmatprep.subr.bf16.mxu0 %v1453
    %1623 = vmatpush1.bf16.msra.mxu0 %v1452
    %1624 = vmatprep.subr.bf16.mxu0 %v1461
    %1625 = vmatpush1.bf16.msra.mxu0 %v1460
    %1626 = vmatprep.subr.bf16.mxu0 0
    %1627 = vmatpush1.bf16.msra.mxu0 0
    %1628 = vmatprep.subr.bf16.mxu0 0
    %1629 = vmatpush1.bf16.msra.mxu0 0
    %1630 = vmatprep.subr.bf16.mxu0 0
    %1631 = vmatpush1.bf16.msra.mxu0 0
    %1632 = vmatprep.subr.bf16.mxu0 0
    %1633 = vmatpush1.bf16.msra.mxu0 0
    %1634 = vmatprep.subr.bf16.mxu0 0
    %1635 = vmatpush1.bf16.msra.mxu0 0
    %1636 = vmatprep.subr.bf16.mxu0 0
    %1637 = vmatpush1.bf16.msra.mxu0 0
    %1638 = vmatprep.subr.bf16.mxu0 0
    %1639 = vmatpush1.bf16.msra.mxu0 0
    %1640 = vmatprep.subr.bf16.mxu0 0
    %1641 = vmatpush1.bf16.msra.mxu0 0
    %1642 = vmatprep.mubr.bf16.mxu0 0
    %1643 = vmatmul.mubr.bf16.gmra.mrb[0].mxu0 %v1101
    %v1644 = vpop.f32.mrb[0].mxu0
    %v1645 = vadd.f32 %v1187, %v1644
    %v1646 = vpop.f32.mrb[0].mxu0
    %v1647 = vadd.f32 %v1191, %v1646
    %v1648 = vpop.f32.mrb[0].mxu0
    %v1649 = vpop.f32.mrb[0].mxu0
    %1650 = vdwg.mxu0
    %1651 = vmatprep.subr.bf16.mxu0 %v1407
    %1652 = vmatpush1.bf16.msra.mxu0 %v1406
    %1653 = vmatprep.subr.bf16.mxu0 %v1415
    %1654 = vmatpush1.bf16.msra.mxu0 %v1414
    %1655 = vmatprep.subr.bf16.mxu0 %v1423
    %1656 = vmatpush1.bf16.msra.mxu0 %v1422
    %1657 = vmatprep.subr.bf16.mxu0 %v1431
    %1658 = vmatpush1.bf16.msra.mxu0 %v1430
    %1659 = vmatprep.subr.bf16.mxu0 %v1439
    %1660 = vmatpush1.bf16.msra.mxu0 %v1438
    %1661 = vmatprep.subr.bf16.mxu0 %v1447
    %1662 = vmatpush1.bf16.msra.mxu0 %v1446
    %1663 = vmatprep.subr.bf16.mxu0 %v1455
    %1664 = vmatpush1.bf16.msra.mxu0 %v1454
    %1665 = vmatprep.subr.bf16.mxu0 %v1463
    %1666 = vmatpush1.bf16.msra.mxu0 %v1462
    %1667 = vmatprep.subr.bf16.mxu0 0
    %1668 = vmatpush1.bf16.msra.mxu0 0
    %1669 = vmatprep.subr.bf16.mxu0 0
    %1670 = vmatpush1.bf16.msra.mxu0 0
    %1671 = vmatprep.subr.bf16.mxu0 0
    %1672 = vmatpush1.bf16.msra.mxu0 0
    %1673 = vmatprep.subr.bf16.mxu0 0
    %1674 = vmatpush1.bf16.msra.mxu0 0
    %1675 = vmatprep.subr.bf16.mxu0 0
    %1676 = vmatpush1.bf16.msra.mxu0 0
    %1677 = vmatprep.subr.bf16.mxu0 0
    %1678 = vmatpush1.bf16.msra.mxu0 0
    %1679 = vmatprep.subr.bf16.mxu0 0
    %1680 = vmatpush1.bf16.msra.mxu0 0
    %1681 = vmatprep.subr.bf16.mxu0 0
    %1682 = vmatpush1.bf16.msra.mxu0 0
    %1683 = vmatprep.mubr.bf16.mxu0 0
    %1684 = vmatmul.mubr.bf16.gmra.mrb[0].mxu0 %v1101
    %v1685 = vpop.f32.mrb[0].mxu0
    %v1686 = vadd.f32 %v1195, %v1685
    %v1687 = vpop.f32.mrb[0].mxu0
    %v1688 = vadd.f32 %v1199, %v1687
    %v1689 = vpop.f32.mrb[0].mxu0
    %v1690 = vpop.f32.mrb[0].mxu0
    %1691 = vdwg.mxu0
    %1692 = vst [vmem:[#allocation13] sm:$0xff] %v1563
    %1693 = vst [vmem:[#allocation13 + $0x8] sm:$0xff] %v1565
    %1694 = vst [vmem:[#allocation13 + $0x10] sm:$0xff] %v1604
    %1695 = vst [vmem:[#allocation13 + $0x18] sm:$0xff] %v1606
    %1696 = vst [vmem:[#allocation13 + $0x20] sm:$0xff] %v1645
    %1697 = vst [vmem:[#allocation13 + $0x28] sm:$0xff] %v1647
    %1698 = vst [vmem:[#allocation13 + $0x30] sm:$0xff] %v1686
    %1699 = vst [vmem:[#allocation13 + $0x38] sm:$0xff] %v1688
    // Predicated region
    $region66: #{tpu_custom_call.1} parent=1 // pred_check
      _
    $region67: #{tpu_custom_call.1} parent=1 // pred_check_branch
      %1701 = sbr.rel (0) target = $region69
    $region68: #{tpu_custom_call.1} parent=1 // pred_region
      %s1703 = ssub.s32 1024, 1024
      %1704 = vsyncadd [#allocation4], %s1703
      %s1706 = sshll.u32 [#allocation13], 4
      %s1707 = int_to_ptr.vmem [resolvable:$true] %s1706
      %1709 = dma.vmem_to_hbm [thread:$0]  %s1707, 1024, %s10, [#allocation4]
    $region69: #{tpu_custom_call.1} parent=1 // pred_fallthru
      _
    // Predicated region
    $region70: #{tpu_custom_call.1} parent=1 // pred_check
      _
    $region71: #{tpu_custom_call.1} parent=1 // pred_check_branch
      %1711 = sbr.rel (0) target = $region73
    $region72: #{tpu_custom_call.1} parent=1 // pred_region
      %s1713 = ssub.s32 256, 256
      %1714 = vsyncadd [#allocation15], %s1713
      %s1716 = sshll.u32 [#allocation14], 4
      %s1717 = int_to_ptr.vmem [resolvable:$true] %s1716
      %1719 = dma.vmem_to_hbm [thread:$0]  %s1717, 256, %s11, [#allocation15]
    $region73: #{tpu_custom_call.1} parent=1 // pred_fallthru
      _
    // Predicated region
    $region74: #{tpu_custom_call.1} parent=1 // pred_check
      _
    $region75: #{tpu_custom_call.1} parent=1 // pred_check_branch
      %1721 = sbr.rel (0) target = $region77
    $region76: #{tpu_custom_call.1} parent=1 // pred_region
      %1722 = dma.done [#allocation4], 1024
    $region77: #{tpu_custom_call.1} parent=1 // pred_fallthru
      _
    // Predicated region
    $region78: #{tpu_custom_call.1} parent=1 // pred_check
      _
    $region79: #{tpu_custom_call.1} parent=1 // pred_check_branch
      %1724 = sbr.rel (0) target = $region81
    $region80: #{tpu_custom_call.1} parent=1 // pred_region
      %1725 = dma.done [#allocation15], 256
    $region81: #{tpu_custom_call.1} parent=1 // pred_fallthru
      _
    %1726 = vsyncpa [#allocation3], 1
    %1727 = vsyncpa [#allocation6], 1
    %1728 = vsyncpa [#allocation9], 1
    %1729 = vsyncpa [#allocation12], 1
    %1730 = vsyncpa [#allocation4], 1
    %1731 = vsyncpa [#allocation15], 1

</llo_original>
